<compile_context>
chip_gen: v5e
topology: v5e:2x2
jax: 0.10.0
libtpu: 0.0.40
codegen_flags: <defaults>
</compile_context>

<pallas_src>
import numpy as np
import jax
import jax.numpy as jnp
from jax.experimental import pallas as pl
from jax.experimental.pallas import tpu as pltpu

H_IN, W_IN = 12, 14      # input spatial dims
H1, W1 = 5, 6            # conv1 output spatial
H2, W2 = 3, 4            # conv2 output spatial
C1, C2 = 32, 64          # conv channel counts
FC3_IN, FC3_OUT = 768, 512
ACTIONS = 4              # synthetic game.action_size

# Static im2col index table for conv1 (k=4, stride=2):
#   row p = oh*W1 + ow ; col q = kh*4 + kw ; value = flat index into the (12,14) image.
_P1_IDX = np.array(
    [[(oh * 2 + kh) * W_IN + (ow * 2 + kw) for kh in range(4) for kw in range(4)]
     for oh in range(H1) for ow in range(W1)], dtype=np.int32)          # (30, 16)


def _tree_sum(xs):
    """Balanced pairwise sum (keeps add chains shallow)."""
    xs = list(xs)
    while len(xs) > 1:
        nxt = [xs[i] + xs[i + 1] for i in range(0, len(xs) - 1, 2)]
        if len(xs) % 2:
            nxt.append(xs[-1])
        xs = nxt
    return xs[0]


def policy_kernel(p1_ref, w1_ref, b1_ref, w2_ref, b2_ref,
                  w3_ref, b3_ref, w4_ref, b4_ref, out_ref):
    f32, bf16 = jnp.float32, jnp.bfloat16

    # ---- conv1 as im2col matmul: (30,16) @ (16,32) + bias, ReLU ----
    h1 = jnp.dot(p1_ref[0], w1_ref[...], preferred_element_type=f32) + b1_ref[...]
    h1 = jnp.maximum(h1, 0.0)                       # (30, 32) f32, row = oh1*6 + ow1
    h1b = h1.astype(bf16)

    # ---- conv2: 9 independent per-tap matmuls over the whole conv1 map ----
    # (A @ W)[r:r+4] == A[r:r+4] @ W, so each conv2 output row only needs contiguous
    # sublane slices of these full-map products.
    taps = [jnp.dot(h1b, w2_ref[t], preferred_element_type=f32)          # (30, 64) f32
            for t in range(9)]

    # ---- conv2 bias/ReLU per output row, then independent fc3 partial dots ----
    fc3_parts = []
    for oh in range(H2):
        contrib = [taps[kh * 3 + kw][(oh + kh) * W1 + kw:(oh + kh) * W1 + kw + W2, :]
                   for kh in range(3) for kw in range(3)]                # 9 x (4, 64)
        blk = jnp.maximum(_tree_sum(contrib) + b2_ref[...], 0.0)         # (4, 64) relu(conv2)
        for ow in range(W2):
            lhs = blk[ow:ow + 1, :].astype(bf16)                         # (1, 64)
            fc3_parts.append(jnp.dot(lhs, w3_ref[oh * W2 + ow],
                                     preferred_element_type=f32))        # (1, 512)

    h3 = jnp.maximum(b3_ref[...] + _tree_sum(fc3_parts), 0.0)            # (1, 512) f32

    # ---- fc4 + softmax ----
    logits = jnp.dot(h3.astype(bf16), w4_ref[...],
                     preferred_element_type=f32) + b4_ref[...]           # (1, ACTIONS)
    m = jnp.max(logits, axis=-1, keepdims=True)
    e = jnp.exp(logits - m)
    inv = pl.reciprocal(jnp.sum(e, axis=-1, keepdims=True), approx=True)
    out_ref[0] = e * inv


def prepare_params(params):
    """One-time (hoisted out of the per-call path) conversion of PyTorch-shaped params
    into kernel-ready layouts: weights bf16, biases f32 row vectors."""
    w1, b1, w2, b2, w3, b3, w4, b4 = params
    w1c = w1.reshape(C1, 16).T.astype(jnp.bfloat16)                                 # (16, 32)
    w2t = jnp.transpose(w2, (2, 3, 1, 0)).reshape(9, C1, C2).astype(jnp.bfloat16)   # (9, 32, 64)
    w3r = jnp.transpose(w3.reshape(FC3_OUT, C2, H2 * W2),
                        (2, 1, 0)).astype(jnp.bfloat16)                             # (12, 64, 512)
    w4r = w4.T.astype(jnp.bfloat16)                                                 # (512, ACTIONS)
    return (w1c, b1.reshape(1, C1).astype(jnp.float32),
            w2t, b2.reshape(1, C2).astype(jnp.float32),
            w3r, b3.reshape(1, FC3_OUT).astype(jnp.float32),
            w4r, b4.reshape(1, ACTIONS).astype(jnp.float32))


def _resident_spec(shape):
    """Full-array block whose index never changes -> stays VMEM-resident across the grid."""
    n = len(shape)
    return pl.BlockSpec(shape, lambda b: (0,) * n)


@jax.jit
def policy_forward(x, kparams):
    """x: (B, 1, 12, 14) f32; kparams: output of prepare_params. Returns (B, ACTIONS) probs."""
    w1c, b1, w2t, b2, w3r, b3, w4r, b4 = kparams
    B = x.shape[0]

    # conv1 im2col: one gather HLO; row order = oh*6+ow, col order = kh*4+kw.
    p1 = x.reshape(B, H_IN * W_IN)[:, _P1_IDX].astype(jnp.bfloat16)      # (B, 30, 16)

    in_specs = [
        pl.BlockSpec((1, H1 * W1, 16), lambda b: (b, 0, 0)),             # per-sample patches
        _resident_spec(w1c.shape), _resident_spec(b1.shape),
        _resident_spec(w2t.shape), _resident_spec(b2.shape),
        _resident_spec(w3r.shape), _resident_spec(b3.shape),
        _resident_spec(w4r.shape), _resident_spec(b4.shape),
    ]
    out_specs = pl.BlockSpec((1, 1, ACTIONS), lambda b: (b, 0, 0))

    probs = pl.pallas_call(
        policy_kernel,
        out_shape=jax.ShapeDtypeStruct((B, 1, ACTIONS), jnp.float32),
        grid=(B,),
        in_specs=in_specs,
        out_specs=out_specs,
        compiler_params=pltpu.CompilerParams(dimension_semantics=("parallel",)),
    )(p1, w1c, b1, w2t, b2, w3r, b3, w4r, b4)
    return probs.reshape(B, ACTIONS)


def ref_forward(x, params):
    """Pure-JAX reference matching the PyTorch forward (applied independently per sample)."""
    w1, b1, w2, b2, w3, b3, w4, b4 = params
    dn = ('NCHW', 'OIHW', 'NCHW')
    y = jax.lax.conv_general_dilated(x, w1, (2, 2), 'VALID', dimension_numbers=dn,
                                     precision=jax.lax.Precision.HIGHEST)
    y = jax.nn.relu(y + b1[None, :, None, None])
    y = jax.lax.conv_general_dilated(y, w2, (1, 1), 'VALID', dimension_numbers=dn,
                                     precision=jax.lax.Precision.HIGHEST)
    y = jax.nn.relu(y + b2[None, :, None, None])
    flat = y.reshape(y.shape[0], -1)                 # per-sample (C, H, W) flatten
    h = jax.nn.relu(flat @ w3.T + b3)
    logits = h @ w4.T + b4
    return jax.nn.softmax(logits, axis=-1)


if __name__ == "__main__":
    key = jax.random.PRNGKey(0)
    ks = jax.random.split(key, 9)
    scale = 0.05
    # Deterministic synthetic parameters in PyTorch shapes (OIHW convs, (out,in) linears).
    params = (
        scale * jax.random.normal(ks[0], (C1, 1, 4, 4), jnp.float32),
        scale * jax.random.normal(ks[1], (C1,), jnp.float32),
        scale * jax.random.normal(ks[2], (C2, C1, 3, 3), jnp.float32),
        scale * jax.random.normal(ks[3], (C2,), jnp.float32),
        scale * jax.random.normal(ks[4], (FC3_OUT, FC3_IN), jnp.float32),
        scale * jax.random.normal(ks[5], (FC3_OUT,), jnp.float32),
        scale * jax.random.normal(ks[6], (ACTIONS, FC3_OUT), jnp.float32),
        scale * jax.random.normal(ks[7], (ACTIONS,), jnp.float32),
    )
    B = 8
    x = jax.random.normal(ks[8], (B, 1, H_IN, W_IN), jnp.float32)

    # One-time weight prep (outside the per-call hot path).
    kparams = jax.block_until_ready(prepare_params(params))

    probs = jax.block_until_ready(policy_forward(x, kparams))
    ref = jax.block_until_ready(ref_forward(x, params))

    assert probs.shape == (B, ACTIONS)
    assert float(jnp.max(jnp.abs(jnp.sum(probs, axis=-1) - 1.0))) < 5e-3
    assert float(jnp.max(jnp.abs(probs - ref))) < 1e-2
    print("KERNEL_OK")
</pallas_src>

<mosaic_0001>
module attributes {stable_mosaic.version = 11 : i64} {
  func.func @policy_kernel(%arg0: i32, %arg1: memref<1x30x16xbf16, #tpu.memory_space<vmem>>, %arg2: memref<16x32xbf16, #tpu.memory_space<vmem>>, %arg3: memref<1x32xf32, #tpu.memory_space<vmem>>, %arg4: memref<9x32x64xbf16, #tpu.memory_space<vmem>>, %arg5: memref<1x64xf32, #tpu.memory_space<vmem>>, %arg6: memref<12x64x512xbf16, #tpu.memory_space<vmem>>, %arg7: memref<1x512xf32, #tpu.memory_space<vmem>>, %arg8: memref<512x4xbf16, #tpu.memory_space<vmem>>, %arg9: memref<1x4xf32, #tpu.memory_space<vmem>>, %arg10: memref<1x1x4xf32, #tpu.memory_space<vmem>>) attributes {dimension_semantics = [#tpu.dimension_semantics<parallel>], iteration_bounds = array<i64: 8>, scalar_prefetch = 0 : i64, scratch_operands = 0 : i64, tpu.core_type = #tpu.core_type<tc>, window_params = [{transform_indices = @transform_0, window_bounds = array<i64: 1, 30, 16>}, {pipeline_mode = #tpu.pipeline_mode<synchronous>, transform_indices = @transform_1, window_bounds = array<i64: 16, 32>}, {pipeline_mode = #tpu.pipeline_mode<synchronous>, transform_indices = @transform_2, window_bounds = array<i64: 1, 32>}, {pipeline_mode = #tpu.pipeline_mode<synchronous>, transform_indices = @transform_3, window_bounds = array<i64: 9, 32, 64>}, {pipeline_mode = #tpu.pipeline_mode<synchronous>, transform_indices = @transform_4, window_bounds = array<i64: 1, 64>}, {pipeline_mode = #tpu.pipeline_mode<synchronous>, transform_indices = @transform_5, window_bounds = array<i64: 12, 64, 512>}, {pipeline_mode = #tpu.pipeline_mode<synchronous>, transform_indices = @transform_6, window_bounds = array<i64: 1, 512>}, {pipeline_mode = #tpu.pipeline_mode<synchronous>, transform_indices = @transform_7, window_bounds = array<i64: 512, 4>}, {pipeline_mode = #tpu.pipeline_mode<synchronous>, transform_indices = @transform_8, window_bounds = array<i64: 1, 4>}, {transform_indices = @transform_9, window_bounds = array<i64: 1, 1, 4>}]} {
    %c0 = arith.constant 0 : index
    %c0_0 = arith.constant 0 : index
    %c0_1 = arith.constant 0 : index
    %0 = vector.load %arg1[%c0, %c0_0, %c0_1] : memref<1x30x16xbf16, #tpu.memory_space<vmem>>, vector<1x30x16xbf16>
    %1 = vector.shape_cast %0 : vector<1x30x16xbf16> to vector<30x16xbf16>
    %c0_2 = arith.constant 0 : index
    %c0_3 = arith.constant 0 : index
    %2 = vector.load %arg2[%c0_2, %c0_3] : memref<16x32xbf16, #tpu.memory_space<vmem>>, vector<16x32xbf16>
    %cst = arith.constant dense<0.000000e+00> : vector<30x32xf32>
    %3 = tpu.matmul %1, %2, %cst {dimension_numbers = #tpu.dot_dimension_numbers<[1], [0], [0], [1], [0, 0, 1, 1], [], []>} : vector<30x16xbf16>, vector<16x32xbf16>, vector<30x32xf32> -> vector<30x32xf32>
    %c0_4 = arith.constant 0 : index
    %c0_5 = arith.constant 0 : index
    %4 = vector.load %arg3[%c0_4, %c0_5] : memref<1x32xf32, #tpu.memory_space<vmem>>, vector<1x32xf32>
    %5 = vector.broadcast %4 : vector<1x32xf32> to vector<30x32xf32>
    %6 = arith.addf %3, %5 : vector<30x32xf32>
    %cst_6 = arith.constant 0.000000e+00 : f32
    %7 = vector.broadcast %cst_6 : f32 to vector<30x32xf32>
    %8 = arith.maximumf %6, %7 : vector<30x32xf32>
    %9 = arith.truncf %8 : vector<30x32xf32> to vector<30x32xbf16>
    %c0_7 = arith.constant 0 : index
    %c0_8 = arith.constant 0 : index
    %c0_9 = arith.constant 0 : index
    %10 = vector.load %arg4[%c0_7, %c0_8, %c0_9] : memref<9x32x64xbf16, #tpu.memory_space<vmem>>, vector<1x32x64xbf16>
    %11 = vector.shape_cast %10 : vector<1x32x64xbf16> to vector<32x64xbf16>
    %cst_10 = arith.constant dense<0.000000e+00> : vector<30x64xf32>
    %12 = tpu.matmul %9, %11, %cst_10 {dimension_numbers = #tpu.dot_dimension_numbers<[1], [0], [0], [1], [0, 0, 1, 1], [], []>} : vector<30x32xbf16>, vector<32x64xbf16>, vector<30x64xf32> -> vector<30x64xf32>
    %c1 = arith.constant 1 : index
    %c0_11 = arith.constant 0 : index
    %c0_12 = arith.constant 0 : index
    %13 = vector.load %arg4[%c1, %c0_11, %c0_12] : memref<9x32x64xbf16, #tpu.memory_space<vmem>>, vector<1x32x64xbf16>
    %14 = vector.shape_cast %13 : vector<1x32x64xbf16> to vector<32x64xbf16>
    %cst_13 = arith.constant dense<0.000000e+00> : vector<30x64xf32>
    %15 = tpu.matmul %9, %14, %cst_13 {dimension_numbers = #tpu.dot_dimension_numbers<[1], [0], [0], [1], [0, 0, 1, 1], [], []>} : vector<30x32xbf16>, vector<32x64xbf16>, vector<30x64xf32> -> vector<30x64xf32>
    %c2 = arith.constant 2 : index
    %c0_14 = arith.constant 0 : index
    %c0_15 = arith.constant 0 : index
    %16 = vector.load %arg4[%c2, %c0_14, %c0_15] : memref<9x32x64xbf16, #tpu.memory_space<vmem>>, vector<1x32x64xbf16>
    %17 = vector.shape_cast %16 : vector<1x32x64xbf16> to vector<32x64xbf16>
    %cst_16 = arith.constant dense<0.000000e+00> : vector<30x64xf32>
    %18 = tpu.matmul %9, %17, %cst_16 {dimension_numbers = #tpu.dot_dimension_numbers<[1], [0], [0], [1], [0, 0, 1, 1], [], []>} : vector<30x32xbf16>, vector<32x64xbf16>, vector<30x64xf32> -> vector<30x64xf32>
    %c3 = arith.constant 3 : index
    %c0_17 = arith.constant 0 : index
    %c0_18 = arith.constant 0 : index
    %19 = vector.load %arg4[%c3, %c0_17, %c0_18] : memref<9x32x64xbf16, #tpu.memory_space<vmem>>, vector<1x32x64xbf16>
    %20 = vector.shape_cast %19 : vector<1x32x64xbf16> to vector<32x64xbf16>
    %cst_19 = arith.constant dense<0.000000e+00> : vector<30x64xf32>
    %21 = tpu.matmul %9, %20, %cst_19 {dimension_numbers = #tpu.dot_dimension_numbers<[1], [0], [0], [1], [0, 0, 1, 1], [], []>} : vector<30x32xbf16>, vector<32x64xbf16>, vector<30x64xf32> -> vector<30x64xf32>
    %c4 = arith.constant 4 : index
    %c0_20 = arith.constant 0 : index
    %c0_21 = arith.constant 0 : index
    %22 = vector.load %arg4[%c4, %c0_20, %c0_21] : memref<9x32x64xbf16, #tpu.memory_space<vmem>>, vector<1x32x64xbf16>
    %23 = vector.shape_cast %22 : vector<1x32x64xbf16> to vector<32x64xbf16>
    %cst_22 = arith.constant dense<0.000000e+00> : vector<30x64xf32>
    %24 = tpu.matmul %9, %23, %cst_22 {dimension_numbers = #tpu.dot_dimension_numbers<[1], [0], [0], [1], [0, 0, 1, 1], [], []>} : vector<30x32xbf16>, vector<32x64xbf16>, vector<30x64xf32> -> vector<30x64xf32>
    %c5 = arith.constant 5 : index
    %c0_23 = arith.constant 0 : index
    %c0_24 = arith.constant 0 : index
    %25 = vector.load %arg4[%c5, %c0_23, %c0_24] : memref<9x32x64xbf16, #tpu.memory_space<vmem>>, vector<1x32x64xbf16>
    %26 = vector.shape_cast %25 : vector<1x32x64xbf16> to vector<32x64xbf16>
    %cst_25 = arith.constant dense<0.000000e+00> : vector<30x64xf32>
    %27 = tpu.matmul %9, %26, %cst_25 {dimension_numbers = #tpu.dot_dimension_numbers<[1], [0], [0], [1], [0, 0, 1, 1], [], []>} : vector<30x32xbf16>, vector<32x64xbf16>, vector<30x64xf32> -> vector<30x64xf32>
    %c6 = arith.constant 6 : index
    %c0_26 = arith.constant 0 : index
    %c0_27 = arith.constant 0 : index
    %28 = vector.load %arg4[%c6, %c0_26, %c0_27] : memref<9x32x64xbf16, #tpu.memory_space<vmem>>, vector<1x32x64xbf16>
    %29 = vector.shape_cast %28 : vector<1x32x64xbf16> to vector<32x64xbf16>
    %cst_28 = arith.constant dense<0.000000e+00> : vector<30x64xf32>
    %30 = tpu.matmul %9, %29, %cst_28 {dimension_numbers = #tpu.dot_dimension_numbers<[1], [0], [0], [1], [0, 0, 1, 1], [], []>} : vector<30x32xbf16>, vector<32x64xbf16>, vector<30x64xf32> -> vector<30x64xf32>
    %c7 = arith.constant 7 : index
    %c0_29 = arith.constant 0 : index
    %c0_30 = arith.constant 0 : index
    %31 = vector.load %arg4[%c7, %c0_29, %c0_30] : memref<9x32x64xbf16, #tpu.memory_space<vmem>>, vector<1x32x64xbf16>
    %32 = vector.shape_cast %31 : vector<1x32x64xbf16> to vector<32x64xbf16>
    %cst_31 = arith.constant dense<0.000000e+00> : vector<30x64xf32>
    %33 = tpu.matmul %9, %32, %cst_31 {dimension_numbers = #tpu.dot_dimension_numbers<[1], [0], [0], [1], [0, 0, 1, 1], [], []>} : vector<30x32xbf16>, vector<32x64xbf16>, vector<30x64xf32> -> vector<30x64xf32>
    %c8 = arith.constant 8 : index
    %c0_32 = arith.constant 0 : index
    %c0_33 = arith.constant 0 : index
    %34 = vector.load %arg4[%c8, %c0_32, %c0_33] : memref<9x32x64xbf16, #tpu.memory_space<vmem>>, vector<1x32x64xbf16>
    %35 = vector.shape_cast %34 : vector<1x32x64xbf16> to vector<32x64xbf16>
    %cst_34 = arith.constant dense<0.000000e+00> : vector<30x64xf32>
    %36 = tpu.matmul %9, %35, %cst_34 {dimension_numbers = #tpu.dot_dimension_numbers<[1], [0], [0], [1], [0, 0, 1, 1], [], []>} : vector<30x32xbf16>, vector<32x64xbf16>, vector<30x64xf32> -> vector<30x64xf32>
    %37 = vector.extract_strided_slice %12 {offsets = [0, 0], sizes = [4, 64], strides = [1, 1]} : vector<30x64xf32> to vector<4x64xf32>
    %38 = vector.extract_strided_slice %15 {offsets = [1, 0], sizes = [4, 64], strides = [1, 1]} : vector<30x64xf32> to vector<4x64xf32>
    %39 = vector.extract_strided_slice %18 {offsets = [2, 0], sizes = [4, 64], strides = [1, 1]} : vector<30x64xf32> to vector<4x64xf32>
    %40 = vector.extract_strided_slice %21 {offsets = [6, 0], sizes = [4, 64], strides = [1, 1]} : vector<30x64xf32> to vector<4x64xf32>
    %41 = vector.extract_strided_slice %24 {offsets = [7, 0], sizes = [4, 64], strides = [1, 1]} : vector<30x64xf32> to vector<4x64xf32>
    %42 = vector.extract_strided_slice %27 {offsets = [8, 0], sizes = [4, 64], strides = [1, 1]} : vector<30x64xf32> to vector<4x64xf32>
    %43 = vector.extract_strided_slice %30 {offsets = [12, 0], sizes = [4, 64], strides = [1, 1]} : vector<30x64xf32> to vector<4x64xf32>
    %44 = vector.extract_strided_slice %33 {offsets = [13, 0], sizes = [4, 64], strides = [1, 1]} : vector<30x64xf32> to vector<4x64xf32>
    %45 = vector.extract_strided_slice %36 {offsets = [14, 0], sizes = [4, 64], strides = [1, 1]} : vector<30x64xf32> to vector<4x64xf32>
    %46 = arith.addf %37, %38 : vector<4x64xf32>
    %47 = arith.addf %39, %40 : vector<4x64xf32>
    %48 = arith.addf %41, %42 : vector<4x64xf32>
    %49 = arith.addf %43, %44 : vector<4x64xf32>
    %50 = arith.addf %46, %47 : vector<4x64xf32>
    %51 = arith.addf %48, %49 : vector<4x64xf32>
    %52 = arith.addf %50, %51 : vector<4x64xf32>
    %53 = arith.addf %52, %45 : vector<4x64xf32>
    %c0_35 = arith.constant 0 : index
    %c0_36 = arith.constant 0 : index
    %54 = vector.load %arg5[%c0_35, %c0_36] : memref<1x64xf32, #tpu.memory_space<vmem>>, vector<1x64xf32>
    %55 = vector.broadcast %54 : vector<1x64xf32> to vector<4x64xf32>
    %56 = arith.addf %53, %55 : vector<4x64xf32>
    %cst_37 = arith.constant 0.000000e+00 : f32
    %57 = vector.broadcast %cst_37 : f32 to vector<4x64xf32>
    %58 = arith.maximumf %56, %57 : vector<4x64xf32>
    %59 = vector.extract_strided_slice %58 {offsets = [0, 0], sizes = [1, 64], strides = [1, 1]} : vector<4x64xf32> to vector<1x64xf32>
    %60 = arith.truncf %59 : vector<1x64xf32> to vector<1x64xbf16>
    %c0_38 = arith.constant 0 : index
    %c0_39 = arith.constant 0 : index
    %c0_40 = arith.constant 0 : index
    %61 = vector.load %arg6[%c0_38, %c0_39, %c0_40] : memref<12x64x512xbf16, #tpu.memory_space<vmem>>, vector<1x64x512xbf16>
    %62 = vector.shape_cast %61 : vector<1x64x512xbf16> to vector<64x512xbf16>
    %cst_41 = arith.constant dense<0.000000e+00> : vector<1x512xf32>
    %63 = tpu.matmul %60, %62, %cst_41 {dimension_numbers = #tpu.dot_dimension_numbers<[1], [0], [0], [1], [0, 0, 1, 1], [], []>} : vector<1x64xbf16>, vector<64x512xbf16>, vector<1x512xf32> -> vector<1x512xf32>
    %64 = vector.extract_strided_slice %58 {offsets = [1, 0], sizes = [1, 64], strides = [1, 1]} : vector<4x64xf32> to vector<1x64xf32>
    %65 = arith.truncf %64 : vector<1x64xf32> to vector<1x64xbf16>
    %c1_42 = arith.constant 1 : index
    %c0_43 = arith.constant 0 : index
    %c0_44 = arith.constant 0 : index
    %66 = vector.load %arg6[%c1_42, %c0_43, %c0_44] : memref<12x64x512xbf16, #tpu.memory_space<vmem>>, vector<1x64x512xbf16>
    %67 = vector.shape_cast %66 : vector<1x64x512xbf16> to vector<64x512xbf16>
    %cst_45 = arith.constant dense<0.000000e+00> : vector<1x512xf32>
    %68 = tpu.matmul %65, %67, %cst_45 {dimension_numbers = #tpu.dot_dimension_numbers<[1], [0], [0], [1], [0, 0, 1, 1], [], []>} : vector<1x64xbf16>, vector<64x512xbf16>, vector<1x512xf32> -> vector<1x512xf32>
    %69 = vector.extract_strided_slice %58 {offsets = [2, 0], sizes = [1, 64], strides = [1, 1]} : vector<4x64xf32> to vector<1x64xf32>
    %70 = arith.truncf %69 : vector<1x64xf32> to vector<1x64xbf16>
    %c2_46 = arith.constant 2 : index
    %c0_47 = arith.constant 0 : index
    %c0_48 = arith.constant 0 : index
    %71 = vector.load %arg6[%c2_46, %c0_47, %c0_48] : memref<12x64x512xbf16, #tpu.memory_space<vmem>>, vector<1x64x512xbf16>
    %72 = vector.shape_cast %71 : vector<1x64x512xbf16> to vector<64x512xbf16>
    %cst_49 = arith.constant dense<0.000000e+00> : vector<1x512xf32>
    %73 = tpu.matmul %70, %72, %cst_49 {dimension_numbers = #tpu.dot_dimension_numbers<[1], [0], [0], [1], [0, 0, 1, 1], [], []>} : vector<1x64xbf16>, vector<64x512xbf16>, vector<1x512xf32> -> vector<1x512xf32>
    %74 = vector.extract_strided_slice %58 {offsets = [3, 0], sizes = [1, 64], strides = [1, 1]} : vector<4x64xf32> to vector<1x64xf32>
    %75 = arith.truncf %74 : vector<1x64xf32> to vector<1x64xbf16>
    %c3_50 = arith.constant 3 : index
    %c0_51 = arith.constant 0 : index
    %c0_52 = arith.constant 0 : index
    %76 = vector.load %arg6[%c3_50, %c0_51, %c0_52] : memref<12x64x512xbf16, #tpu.memory_space<vmem>>, vector<1x64x512xbf16>
    %77 = vector.shape_cast %76 : vector<1x64x512xbf16> to vector<64x512xbf16>
    %cst_53 = arith.constant dense<0.000000e+00> : vector<1x512xf32>
    %78 = tpu.matmul %75, %77, %cst_53 {dimension_numbers = #tpu.dot_dimension_numbers<[1], [0], [0], [1], [0, 0, 1, 1], [], []>} : vector<1x64xbf16>, vector<64x512xbf16>, vector<1x512xf32> -> vector<1x512xf32>
    %79 = vector.extract_strided_slice %12 {offsets = [6, 0], sizes = [4, 64], strides = [1, 1]} : vector<30x64xf32> to vector<4x64xf32>
    %80 = vector.extract_strided_slice %15 {offsets = [7, 0], sizes = [4, 64], strides = [1, 1]} : vector<30x64xf32> to vector<4x64xf32>
    %81 = vector.extract_strided_slice %18 {offsets = [8, 0], sizes = [4, 64], strides = [1, 1]} : vector<30x64xf32> to vector<4x64xf32>
    %82 = vector.extract_strided_slice %21 {offsets = [12, 0], sizes = [4, 64], strides = [1, 1]} : vector<30x64xf32> to vector<4x64xf32>
    %83 = vector.extract_strided_slice %24 {offsets = [13, 0], sizes = [4, 64], strides = [1, 1]} : vector<30x64xf32> to vector<4x64xf32>
    %84 = vector.extract_strided_slice %27 {offsets = [14, 0], sizes = [4, 64], strides = [1, 1]} : vector<30x64xf32> to vector<4x64xf32>
    %85 = vector.extract_strided_slice %30 {offsets = [18, 0], sizes = [4, 64], strides = [1, 1]} : vector<30x64xf32> to vector<4x64xf32>
    %86 = vector.extract_strided_slice %33 {offsets = [19, 0], sizes = [4, 64], strides = [1, 1]} : vector<30x64xf32> to vector<4x64xf32>
    %87 = vector.extract_strided_slice %36 {offsets = [20, 0], sizes = [4, 64], strides = [1, 1]} : vector<30x64xf32> to vector<4x64xf32>
    %88 = arith.addf %79, %80 : vector<4x64xf32>
    %89 = arith.addf %81, %82 : vector<4x64xf32>
    %90 = arith.addf %83, %84 : vector<4x64xf32>
    %91 = arith.addf %85, %86 : vector<4x64xf32>
    %92 = arith.addf %88, %89 : vector<4x64xf32>
    %93 = arith.addf %90, %91 : vector<4x64xf32>
    %94 = arith.addf %92, %93 : vector<4x64xf32>
    %95 = arith.addf %94, %87 : vector<4x64xf32>
    %c0_54 = arith.constant 0 : index
    %c0_55 = arith.constant 0 : index
    %96 = vector.load %arg5[%c0_54, %c0_55] : memref<1x64xf32, #tpu.memory_space<vmem>>, vector<1x64xf32>
    %97 = vector.broadcast %96 : vector<1x64xf32> to vector<4x64xf32>
    %98 = arith.addf %95, %97 : vector<4x64xf32>
    %cst_56 = arith.constant 0.000000e+00 : f32
    %99 = vector.broadcast %cst_56 : f32 to vector<4x64xf32>
    %100 = arith.maximumf %98, %99 : vector<4x64xf32>
    %101 = vector.extract_strided_slice %100 {offsets = [0, 0], sizes = [1, 64], strides = [1, 1]} : vector<4x64xf32> to vector<1x64xf32>
    %102 = arith.truncf %101 : vector<1x64xf32> to vector<1x64xbf16>
    %c4_57 = arith.constant 4 : index
    %c0_58 = arith.constant 0 : index
    %c0_59 = arith.constant 0 : index
    %103 = vector.load %arg6[%c4_57, %c0_58, %c0_59] : memref<12x64x512xbf16, #tpu.memory_space<vmem>>, vector<1x64x512xbf16>
    %104 = vector.shape_cast %103 : vector<1x64x512xbf16> to vector<64x512xbf16>
    %cst_60 = arith.constant dense<0.000000e+00> : vector<1x512xf32>
    %105 = tpu.matmul %102, %104, %cst_60 {dimension_numbers = #tpu.dot_dimension_numbers<[1], [0], [0], [1], [0, 0, 1, 1], [], []>} : vector<1x64xbf16>, vector<64x512xbf16>, vector<1x512xf32> -> vector<1x512xf32>
    %106 = vector.extract_strided_slice %100 {offsets = [1, 0], sizes = [1, 64], strides = [1, 1]} : vector<4x64xf32> to vector<1x64xf32>
    %107 = arith.truncf %106 : vector<1x64xf32> to vector<1x64xbf16>
    %c5_61 = arith.constant 5 : index
    %c0_62 = arith.constant 0 : index
    %c0_63 = arith.constant 0 : index
    %108 = vector.load %arg6[%c5_61, %c0_62, %c0_63] : memref<12x64x512xbf16, #tpu.memory_space<vmem>>, vector<1x64x512xbf16>
    %109 = vector.shape_cast %108 : vector<1x64x512xbf16> to vector<64x512xbf16>
    %cst_64 = arith.constant dense<0.000000e+00> : vector<1x512xf32>
    %110 = tpu.matmul %107, %109, %cst_64 {dimension_numbers = #tpu.dot_dimension_numbers<[1], [0], [0], [1], [0, 0, 1, 1], [], []>} : vector<1x64xbf16>, vector<64x512xbf16>, vector<1x512xf32> -> vector<1x512xf32>
    %111 = vector.extract_strided_slice %100 {offsets = [2, 0], sizes = [1, 64], strides = [1, 1]} : vector<4x64xf32> to vector<1x64xf32>
    %112 = arith.truncf %111 : vector<1x64xf32> to vector<1x64xbf16>
    %c6_65 = arith.constant 6 : index
    %c0_66 = arith.constant 0 : index
    %c0_67 = arith.constant 0 : index
    %113 = vector.load %arg6[%c6_65, %c0_66, %c0_67] : memref<12x64x512xbf16, #tpu.memory_space<vmem>>, vector<1x64x512xbf16>
    %114 = vector.shape_cast %113 : vector<1x64x512xbf16> to vector<64x512xbf16>
    %cst_68 = arith.constant dense<0.000000e+00> : vector<1x512xf32>
    %115 = tpu.matmul %112, %114, %cst_68 {dimension_numbers = #tpu.dot_dimension_numbers<[1], [0], [0], [1], [0, 0, 1, 1], [], []>} : vector<1x64xbf16>, vector<64x512xbf16>, vector<1x512xf32> -> vector<1x512xf32>
    %116 = vector.extract_strided_slice %100 {offsets = [3, 0], sizes = [1, 64], strides = [1, 1]} : vector<4x64xf32> to vector<1x64xf32>
    %117 = arith.truncf %116 : vector<1x64xf32> to vector<1x64xbf16>
    %c7_69 = arith.constant 7 : index
    %c0_70 = arith.constant 0 : index
    %c0_71 = arith.constant 0 : index
    %118 = vector.load %arg6[%c7_69, %c0_70, %c0_71] : memref<12x64x512xbf16, #tpu.memory_space<vmem>>, vector<1x64x512xbf16>
    %119 = vector.shape_cast %118 : vector<1x64x512xbf16> to vector<64x512xbf16>
    %cst_72 = arith.constant dense<0.000000e+00> : vector<1x512xf32>
    %120 = tpu.matmul %117, %119, %cst_72 {dimension_numbers = #tpu.dot_dimension_numbers<[1], [0], [0], [1], [0, 0, 1, 1], [], []>} : vector<1x64xbf16>, vector<64x512xbf16>, vector<1x512xf32> -> vector<1x512xf32>
    %121 = vector.extract_strided_slice %12 {offsets = [12, 0], sizes = [4, 64], strides = [1, 1]} : vector<30x64xf32> to vector<4x64xf32>
    %122 = vector.extract_strided_slice %15 {offsets = [13, 0], sizes = [4, 64], strides = [1, 1]} : vector<30x64xf32> to vector<4x64xf32>
    %123 = vector.extract_strided_slice %18 {offsets = [14, 0], sizes = [4, 64], strides = [1, 1]} : vector<30x64xf32> to vector<4x64xf32>
    %124 = vector.extract_strided_slice %21 {offsets = [18, 0], sizes = [4, 64], strides = [1, 1]} : vector<30x64xf32> to vector<4x64xf32>
    %125 = vector.extract_strided_slice %24 {offsets = [19, 0], sizes = [4, 64], strides = [1, 1]} : vector<30x64xf32> to vector<4x64xf32>
    %126 = vector.extract_strided_slice %27 {offsets = [20, 0], sizes = [4, 64], strides = [1, 1]} : vector<30x64xf32> to vector<4x64xf32>
    %127 = vector.extract_strided_slice %30 {offsets = [24, 0], sizes = [4, 64], strides = [1, 1]} : vector<30x64xf32> to vector<4x64xf32>
    %128 = vector.extract_strided_slice %33 {offsets = [25, 0], sizes = [4, 64], strides = [1, 1]} : vector<30x64xf32> to vector<4x64xf32>
    %129 = vector.extract_strided_slice %36 {offsets = [26, 0], sizes = [4, 64], strides = [1, 1]} : vector<30x64xf32> to vector<4x64xf32>
    %130 = arith.addf %121, %122 : vector<4x64xf32>
    %131 = arith.addf %123, %124 : vector<4x64xf32>
    %132 = arith.addf %125, %126 : vector<4x64xf32>
    %133 = arith.addf %127, %128 : vector<4x64xf32>
    %134 = arith.addf %130, %131 : vector<4x64xf32>
    %135 = arith.addf %132, %133 : vector<4x64xf32>
    %136 = arith.addf %134, %135 : vector<4x64xf32>
    %137 = arith.addf %136, %129 : vector<4x64xf32>
    %c0_73 = arith.constant 0 : index
    %c0_74 = arith.constant 0 : index
    %138 = vector.load %arg5[%c0_73, %c0_74] : memref<1x64xf32, #tpu.memory_space<vmem>>, vector<1x64xf32>
    %139 = vector.broadcast %138 : vector<1x64xf32> to vector<4x64xf32>
    %140 = arith.addf %137, %139 : vector<4x64xf32>
    %cst_75 = arith.constant 0.000000e+00 : f32
    %141 = vector.broadcast %cst_75 : f32 to vector<4x64xf32>
    %142 = arith.maximumf %140, %141 : vector<4x64xf32>
    %143 = vector.extract_strided_slice %142 {offsets = [0, 0], sizes = [1, 64], strides = [1, 1]} : vector<4x64xf32> to vector<1x64xf32>
    %144 = arith.truncf %143 : vector<1x64xf32> to vector<1x64xbf16>
    %c8_76 = arith.constant 8 : index
    %c0_77 = arith.constant 0 : index
    %c0_78 = arith.constant 0 : index
    %145 = vector.load %arg6[%c8_76, %c0_77, %c0_78] : memref<12x64x512xbf16, #tpu.memory_space<vmem>>, vector<1x64x512xbf16>
    %146 = vector.shape_cast %145 : vector<1x64x512xbf16> to vector<64x512xbf16>
    %cst_79 = arith.constant dense<0.000000e+00> : vector<1x512xf32>
    %147 = tpu.matmul %144, %146, %cst_79 {dimension_numbers = #tpu.dot_dimension_numbers<[1], [0], [0], [1], [0, 0, 1, 1], [], []>} : vector<1x64xbf16>, vector<64x512xbf16>, vector<1x512xf32> -> vector<1x512xf32>
    %148 = vector.extract_strided_slice %142 {offsets = [1, 0], sizes = [1, 64], strides = [1, 1]} : vector<4x64xf32> to vector<1x64xf32>
    %149 = arith.truncf %148 : vector<1x64xf32> to vector<1x64xbf16>
    %c9 = arith.constant 9 : index
    %c0_80 = arith.constant 0 : index
    %c0_81 = arith.constant 0 : index
    %150 = vector.load %arg6[%c9, %c0_80, %c0_81] : memref<12x64x512xbf16, #tpu.memory_space<vmem>>, vector<1x64x512xbf16>
    %151 = vector.shape_cast %150 : vector<1x64x512xbf16> to vector<64x512xbf16>
    %cst_82 = arith.constant dense<0.000000e+00> : vector<1x512xf32>
    %152 = tpu.matmul %149, %151, %cst_82 {dimension_numbers = #tpu.dot_dimension_numbers<[1], [0], [0], [1], [0, 0, 1, 1], [], []>} : vector<1x64xbf16>, vector<64x512xbf16>, vector<1x512xf32> -> vector<1x512xf32>
    %153 = vector.extract_strided_slice %142 {offsets = [2, 0], sizes = [1, 64], strides = [1, 1]} : vector<4x64xf32> to vector<1x64xf32>
    %154 = arith.truncf %153 : vector<1x64xf32> to vector<1x64xbf16>
    %c10 = arith.constant 10 : index
    %c0_83 = arith.constant 0 : index
    %c0_84 = arith.constant 0 : index
    %155 = vector.load %arg6[%c10, %c0_83, %c0_84] : memref<12x64x512xbf16, #tpu.memory_space<vmem>>, vector<1x64x512xbf16>
    %156 = vector.shape_cast %155 : vector<1x64x512xbf16> to vector<64x512xbf16>
    %cst_85 = arith.constant dense<0.000000e+00> : vector<1x512xf32>
    %157 = tpu.matmul %154, %156, %cst_85 {dimension_numbers = #tpu.dot_dimension_numbers<[1], [0], [0], [1], [0, 0, 1, 1], [], []>} : vector<1x64xbf16>, vector<64x512xbf16>, vector<1x512xf32> -> vector<1x512xf32>
    %158 = vector.extract_strided_slice %142 {offsets = [3, 0], sizes = [1, 64], strides = [1, 1]} : vector<4x64xf32> to vector<1x64xf32>
    %159 = arith.truncf %158 : vector<1x64xf32> to vector<1x64xbf16>
    %c11 = arith.constant 11 : index
    %c0_86 = arith.constant 0 : index
    %c0_87 = arith.constant 0 : index
    %160 = vector.load %arg6[%c11, %c0_86, %c0_87] : memref<12x64x512xbf16, #tpu.memory_space<vmem>>, vector<1x64x512xbf16>
    %161 = vector.shape_cast %160 : vector<1x64x512xbf16> to vector<64x512xbf16>
    %cst_88 = arith.constant dense<0.000000e+00> : vector<1x512xf32>
    %162 = tpu.matmul %159, %161, %cst_88 {dimension_numbers = #tpu.dot_dimension_numbers<[1], [0], [0], [1], [0, 0, 1, 1], [], []>} : vector<1x64xbf16>, vector<64x512xbf16>, vector<1x512xf32> -> vector<1x512xf32>
    %c0_89 = arith.constant 0 : index
    %c0_90 = arith.constant 0 : index
    %163 = vector.load %arg7[%c0_89, %c0_90] : memref<1x512xf32, #tpu.memory_space<vmem>>, vector<1x512xf32>
    %164 = arith.addf %63, %68 : vector<1x512xf32>
    %165 = arith.addf %73, %78 : vector<1x512xf32>
    %166 = arith.addf %105, %110 : vector<1x512xf32>
    %167 = arith.addf %115, %120 : vector<1x512xf32>
    %168 = arith.addf %147, %152 : vector<1x512xf32>
    %169 = arith.addf %157, %162 : vector<1x512xf32>
    %170 = arith.addf %164, %165 : vector<1x512xf32>
    %171 = arith.addf %166, %167 : vector<1x512xf32>
    %172 = arith.addf %168, %169 : vector<1x512xf32>
    %173 = arith.addf %170, %171 : vector<1x512xf32>
    %174 = arith.addf %173, %172 : vector<1x512xf32>
    %175 = arith.addf %163, %174 : vector<1x512xf32>
    %cst_91 = arith.constant 0.000000e+00 : f32
    %176 = vector.broadcast %cst_91 : f32 to vector<1x512xf32>
    %177 = arith.maximumf %175, %176 : vector<1x512xf32>
    %178 = arith.truncf %177 : vector<1x512xf32> to vector<1x512xbf16>
    %c0_92 = arith.constant 0 : index
    %c0_93 = arith.constant 0 : index
    %179 = vector.load %arg8[%c0_92, %c0_93] : memref<512x4xbf16, #tpu.memory_space<vmem>>, vector<512x4xbf16>
    %cst_94 = arith.constant dense<0.000000e+00> : vector<1x4xf32>
    %180 = tpu.matmul %178, %179, %cst_94 {dimension_numbers = #tpu.dot_dimension_numbers<[1], [0], [0], [1], [0, 0, 1, 1], [], []>} : vector<1x512xbf16>, vector<512x4xbf16>, vector<1x4xf32> -> vector<1x4xf32>
    %c0_95 = arith.constant 0 : index
    %c0_96 = arith.constant 0 : index
    %181 = vector.load %arg9[%c0_95, %c0_96] : memref<1x4xf32, #tpu.memory_space<vmem>>, vector<1x4xf32>
    %182 = arith.addf %180, %181 : vector<1x4xf32>
    %cst_97 = arith.constant dense<0xFF800000> : vector<1xf32>
    %183 = vector.multi_reduction <maximumf>, %182, %cst_97 [1] : vector<1x4xf32> to vector<1xf32>
    %184 = vector.shape_cast %183 : vector<1xf32> to vector<1x1xf32>
    %185 = vector.broadcast %184 : vector<1x1xf32> to vector<1x4xf32>
    %186 = arith.subf %182, %185 : vector<1x4xf32>
    %187 = math.exp %186 : vector<1x4xf32>
    %cst_98 = arith.constant dense<0.000000e+00> : vector<1xf32>
    %188 = vector.multi_reduction <add>, %187, %cst_98 [1] : vector<1x4xf32> to vector<1xf32>
    %189 = vector.shape_cast %188 : vector<1xf32> to vector<1x1xf32>
    %190 = tpu.reciprocal %189 {approx = true} : vector<1x1xf32> -> vector<1x1xf32>
    %191 = vector.broadcast %190 : vector<1x1xf32> to vector<1x4xf32>
    %192 = arith.mulf %187, %191 : vector<1x4xf32>
    %c0_99 = arith.constant 0 : index
    %c0_100 = arith.constant 0 : index
    %c0_101 = arith.constant 0 : index
    %193 = vector.load %arg10[%c0_99, %c0_100, %c0_101] : memref<1x1x4xf32, #tpu.memory_space<vmem>>, vector<1x1x4xf32>
    %194 = vector.shape_cast %193 : vector<1x1x4xf32> to vector<1x4xf32>
    %195 = vector.shape_cast %192 : vector<1x4xf32> to vector<1x1x4xf32>
    tpu.vector_store %arg10[%c0_99, %c0_100, %c0_101], %195 {strides = array<i32>} : memref<1x1x4xf32, #tpu.memory_space<vmem>>, vector<1x1x4xf32>,
    return
  }
  func.func @transform_0(%arg0: i32) -> (i32, i32, i32) {
    %c0_i32 = arith.constant 0 : i32
    %c0_i32_0 = arith.constant 0 : i32
    %c0_i32_1 = arith.constant 0 : i32
    return %arg0, %c0_i32, %c0_i32_0 : i32, i32, i32
  }
  func.func @transform_1(%arg0: i32) -> (i32, i32) {
    %c0_i32 = arith.constant 0 : i32
    %c0_i32_0 = arith.constant 0 : i32
    %c0_i32_1 = arith.constant 0 : i32
    return %c0_i32, %c0_i32_0 : i32, i32
  }
  func.func @transform_2(%arg0: i32) -> (i32, i32) {
    %c0_i32 = arith.constant 0 : i32
    %c0_i32_0 = arith.constant 0 : i32
    %c0_i32_1 = arith.constant 0 : i32
    return %c0_i32, %c0_i32_0 : i32, i32
  }
  func.func @transform_3(%arg0: i32) -> (i32, i32, i32) {
    %c0_i32 = arith.constant 0 : i32
    %c0_i32_0 = arith.constant 0 : i32
    %c0_i32_1 = arith.constant 0 : i32
    %c0_i32_2 = arith.constant 0 : i32
    return %c0_i32, %c0_i32_0, %c0_i32_1 : i32, i32, i32
  }
  func.func @transform_4(%arg0: i32) -> (i32, i32) {
    %c0_i32 = arith.constant 0 : i32
    %c0_i32_0 = arith.constant 0 : i32
    %c0_i32_1 = arith.constant 0 : i32
    return %c0_i32, %c0_i32_0 : i32, i32
  }
  func.func @transform_5(%arg0: i32) -> (i32, i32, i32) {
    %c0_i32 = arith.constant 0 : i32
    %c0_i32_0 = arith.constant 0 : i32
    %c0_i32_1 = arith.constant 0 : i32
    %c0_i32_2 = arith.constant 0 : i32
    return %c0_i32, %c0_i32_0, %c0_i32_1 : i32, i32, i32
  }
  func.func @transform_6(%arg0: i32) -> (i32, i32) {
    %c0_i32 = arith.constant 0 : i32
    %c0_i32_0 = arith.constant 0 : i32
    %c0_i32_1 = arith.constant 0 : i32
    return %c0_i32, %c0_i32_0 : i32, i32
  }
  func.func @transform_7(%arg0: i32) -> (i32, i32) {
    %c0_i32 = arith.constant 0 : i32
    %c0_i32_0 = arith.constant 0 : i32
    %c0_i32_1 = arith.constant 0 : i32
    return %c0_i32, %c0_i32_0 : i32, i32
  }
  func.func @transform_8(%arg0: i32) -> (i32, i32) {
    %c0_i32 = arith.constant 0 : i32
    %c0_i32_0 = arith.constant 0 : i32
    %c0_i32_1 = arith.constant 0 : i32
    return %c0_i32, %c0_i32_0 : i32, i32
  }
  func.func @transform_9(%arg0: i32) -> (i32, i32, i32) {
    %c0_i32 = arith.constant 0 : i32
    %c0_i32_0 = arith.constant 0 : i32
    %c0_i32_1 = arith.constant 0 : i32
    return %arg0, %c0_i32, %c0_i32_0 : i32, i32, i32
  }
}

</mosaic_0001>

<llo_original>
// kernel: policy_forward.1
$region0: #{policy_forward.1}
  #allocation0 [shape = 'u32[]', space=smem, size = 0x4, offset = 0x4, fixed_abs, tag = 'smem constant byte address 0x4 - core index']
  #allocation1 [shape = 'u32[72,128]{1,0:T(1,128)}', space=vmem, size = 0x9000, scoped, tag = 'internal scratch']
  %s0 = inlined_call_operand.vmem [shape: bf16[8,30,16], index: 0, kind: input, shape index: {}]
  %s1 = inlined_call_operand.vmem [shape: bf16[16,32], index: 1, kind: input, shape index: {}]
  %s2 = inlined_call_operand.vmem [shape: f32[1,32], index: 2, kind: input, shape index: {}]
  %s3 = inlined_call_operand.vmem [shape: bf16[9,32,64], index: 3, kind: input, shape index: {}]
  %s4 = inlined_call_operand.vmem [shape: f32[1,64], index: 4, kind: input, shape index: {}]
  %s5 = inlined_call_operand.vmem [shape: bf16[12,64,512], index: 5, kind: input, shape index: {}]
  %s6 = inlined_call_operand.vmem [shape: f32[1,512], index: 6, kind: input, shape index: {}]
  %s7 = inlined_call_operand.vmem [shape: bf16[512,4], index: 7, kind: input, shape index: {}]
  %s8 = inlined_call_operand.vmem [shape: f32[1,4], index: 8, kind: input, shape index: {}]
  %s9 = inlined_call_operand.vmem [shape: f32[8,1,4], index: 9, kind: output, shape index: {}]
  %s10 = sld [smem:[#allocation0]]
  $region69: #{policy_forward.1} parent=0
    _
  %s12 = ssub.s32 1, %s10
  %s13 = scalar_select 0, %s12, %s10
  loop: start=0, step=1, limit=10
  $region2: #{policy_forward.1} parent=0 // loop_pre_header
    _
  $region3: #{policy_forward.1} parent=0 // loop_header
    %s15 = sphi 0, %s19
    %p16 = scmp.ge.s32.totalorder %s15, 10
    %s25 = sphi 0, %s27
    %s28 = sphi 0, %s25
    %s29 = sphi 0, %s28
    %s45 = sphi 0, %s29
    %s49 = sphi 0, %s49
    %s51 = sphi 0, %s49
    %s52 = sphi 0, %s51
    %s66 = sphi 0, %s52
    %s70 = sphi 0, %s70
    %s72 = sphi 0, %s70
    %s73 = sphi 0, %s72
    %s87 = sphi 0, %s73
    %s91 = sphi 0, %s91
    %s93 = sphi 0, %s91
    %s94 = sphi 0, %s93
    %s108 = sphi 0, %s94
    %s112 = sphi 0, %s112
    %s114 = sphi 0, %s112
    %s115 = sphi 0, %s114
    %s129 = sphi 0, %s115
    %s133 = sphi 0, %s133
    %s135 = sphi 0, %s133
    %s136 = sphi 0, %s135
    %s150 = sphi 0, %s136
    %s154 = sphi 0, %s154
    %s156 = sphi 0, %s154
    %s157 = sphi 0, %s156
    %s171 = sphi 0, %s157
    %s175 = sphi 0, %s175
    %s177 = sphi 0, %s175
    %s178 = sphi 0, %s177
    %s192 = sphi 0, %s178
    %s196 = sphi 0, %s196
    %s198 = sphi 0, %s196
    %s199 = sphi 0, %s198
    %s213 = sphi 0, %s199
    %s219 = sphi 0, %s221
    %s222 = sphi 0, %s219
    %s223 = sphi 0, %s222
    %s239 = sphi 0, %s223
  $region4: #{policy_forward.1} parent=0 // loop_header_branch
    %18 = sbr.rel (%p16) target = $region8
  $region5: #{policy_forward.1} parent=0 // loop_body
    %s20 = ssub.s32 %s15, 1
    %s21 = ssub.s32 %s15, 2
    %s22 = sadd.s32 %s15, 1
    %s23 = ssub.s32 %s15, %s22
    %p24 = scmp.eq.s32.totalorder %s23, 0
    %s26 = sadd.s32 %s25, 1
    %s27 = scalar_select %p24, %s25, %s26
    %p30 = pneg %p24
    %p31 = scmp.eq.s32.totalorder %s15, 7
    %p32 = por %p30, %p31
    %p33 = scmp.ne.s32.totalorder %s25, %s28
    %p34 = scmp.eq.s32.totalorder %s15, 0
    %p35 = por %p33, %p34
    %p36 = scmp.ne.s32.totalorder %s25, %s28
    %p37 = scmp.eq.s32.totalorder %s20, 7
    %p38 = por %p36, %p37
    %p39 = scmp.ne.s32.totalorder %s28, %s29
    %p40 = scmp.eq.s32.totalorder %s20, 0
    %p41 = por %p39, %p40
    %p42 = scmp.ne.s32.totalorder %s28, %s29
    %p43 = scmp.eq.s32.totalorder %s21, 7
    %p44 = por %p42, %p43
    %p46 = scmp.ne.s32.totalorder %s29, %s45
    %p47 = scmp.eq.s32.totalorder %s21, 0
    %p48 = por %p46, %p47
    %s50 = sadd.s32 %s49, 1
    %p53 = scmp.eq.s32.totalorder %s15, 7
    %p54 = scmp.ne.s32.totalorder %s49, %s51
    %p55 = scmp.eq.s32.totalorder %s15, 0
    %p56 = por %p54, %p55
    %p57 = scmp.ne.s32.totalorder %s49, %s51
    %p58 = scmp.eq.s32.totalorder %s20, 7
    %p59 = por %p57, %p58
    %p60 = scmp.ne.s32.totalorder %s51, %s52
    %p61 = scmp.eq.s32.totalorder %s20, 0
    %p62 = por %p60, %p61
    %p63 = scmp.ne.s32.totalorder %s51, %s52
    %p64 = scmp.eq.s32.totalorder %s21, 7
    %p65 = por %p63, %p64
    %p67 = scmp.ne.s32.totalorder %s52, %s66
    %p68 = scmp.eq.s32.totalorder %s21, 0
    %p69 = por %p67, %p68
    %s71 = sadd.s32 %s70, 1
    %p74 = scmp.eq.s32.totalorder %s15, 7
    %p75 = scmp.ne.s32.totalorder %s70, %s72
    %p76 = scmp.eq.s32.totalorder %s15, 0
    %p77 = por %p75, %p76
    %p78 = scmp.ne.s32.totalorder %s70, %s72
    %p79 = scmp.eq.s32.totalorder %s20, 7
    %p80 = por %p78, %p79
    %p81 = scmp.ne.s32.totalorder %s72, %s73
    %p82 = scmp.eq.s32.totalorder %s20, 0
    %p83 = por %p81, %p82
    %p84 = scmp.ne.s32.totalorder %s72, %s73
    %p85 = scmp.eq.s32.totalorder %s21, 7
    %p86 = por %p84, %p85
    %p88 = scmp.ne.s32.totalorder %s73, %s87
    %p89 = scmp.eq.s32.totalorder %s21, 0
    %p90 = por %p88, %p89
    %s92 = sadd.s32 %s91, 1
    %p95 = scmp.eq.s32.totalorder %s15, 7
    %p96 = scmp.ne.s32.totalorder %s91, %s93
    %p97 = scmp.eq.s32.totalorder %s15, 0
    %p98 = por %p96, %p97
    %p99 = scmp.ne.s32.totalorder %s91, %s93
    %p100 = scmp.eq.s32.totalorder %s20, 7
    %p101 = por %p99, %p100
    %p102 = scmp.ne.s32.totalorder %s93, %s94
    %p103 = scmp.eq.s32.totalorder %s20, 0
    %p104 = por %p102, %p103
    %p105 = scmp.ne.s32.totalorder %s93, %s94
    %p106 = scmp.eq.s32.totalorder %s21, 7
    %p107 = por %p105, %p106
    %p109 = scmp.ne.s32.totalorder %s94, %s108
    %p110 = scmp.eq.s32.totalorder %s21, 0
    %p111 = por %p109, %p110
    %s113 = sadd.s32 %s112, 1
    %p116 = scmp.eq.s32.totalorder %s15, 7
    %p117 = scmp.ne.s32.totalorder %s112, %s114
    %p118 = scmp.eq.s32.totalorder %s15, 0
    %p119 = por %p117, %p118
    %p120 = scmp.ne.s32.totalorder %s112, %s114
    %p121 = scmp.eq.s32.totalorder %s20, 7
    %p122 = por %p120, %p121
    %p123 = scmp.ne.s32.totalorder %s114, %s115
    %p124 = scmp.eq.s32.totalorder %s20, 0
    %p125 = por %p123, %p124
    %p126 = scmp.ne.s32.totalorder %s114, %s115
    %p127 = scmp.eq.s32.totalorder %s21, 7
    %p128 = por %p126, %p127
    %p130 = scmp.ne.s32.totalorder %s115, %s129
    %p131 = scmp.eq.s32.totalorder %s21, 0
    %p132 = por %p130, %p131
    %s134 = sadd.s32 %s133, 1
    %p137 = scmp.eq.s32.totalorder %s15, 7
    %p138 = scmp.ne.s32.totalorder %s133, %s135
    %p139 = scmp.eq.s32.totalorder %s15, 0
    %p140 = por %p138, %p139
    %p141 = scmp.ne.s32.totalorder %s133, %s135
    %p142 = scmp.eq.s32.totalorder %s20, 7
    %p143 = por %p141, %p142
    %p144 = scmp.ne.s32.totalorder %s135, %s136
    %p145 = scmp.eq.s32.totalorder %s20, 0
    %p146 = por %p144, %p145
    %p147 = scmp.ne.s32.totalorder %s135, %s136
    %p148 = scmp.eq.s32.totalorder %s21, 7
    %p149 = por %p147, %p148
    %p151 = scmp.ne.s32.totalorder %s136, %s150
    %p152 = scmp.eq.s32.totalorder %s21, 0
    %p153 = por %p151, %p152
    %s155 = sadd.s32 %s154, 1
    %p158 = scmp.eq.s32.totalorder %s15, 7
    %p159 = scmp.ne.s32.totalorder %s154, %s156
    %p160 = scmp.eq.s32.totalorder %s15, 0
    %p161 = por %p159, %p160
    %p162 = scmp.ne.s32.totalorder %s154, %s156
    %p163 = scmp.eq.s32.totalorder %s20, 7
    %p164 = por %p162, %p163
    %p165 = scmp.ne.s32.totalorder %s156, %s157
    %p166 = scmp.eq.s32.totalorder %s20, 0
    %p167 = por %p165, %p166
    %p168 = scmp.ne.s32.totalorder %s156, %s157
    %p169 = scmp.eq.s32.totalorder %s21, 7
    %p170 = por %p168, %p169
    %p172 = scmp.ne.s32.totalorder %s157, %s171
    %p173 = scmp.eq.s32.totalorder %s21, 0
    %p174 = por %p172, %p173
    %s176 = sadd.s32 %s175, 1
    %p179 = scmp.eq.s32.totalorder %s15, 7
    %p180 = scmp.ne.s32.totalorder %s175, %s177
    %p181 = scmp.eq.s32.totalorder %s15, 0
    %p182 = por %p180, %p181
    %p183 = scmp.ne.s32.totalorder %s175, %s177
    %p184 = scmp.eq.s32.totalorder %s20, 7
    %p185 = por %p183, %p184
    %p186 = scmp.ne.s32.totalorder %s177, %s178
    %p187 = scmp.eq.s32.totalorder %s20, 0
    %p188 = por %p186, %p187
    %p189 = scmp.ne.s32.totalorder %s177, %s178
    %p190 = scmp.eq.s32.totalorder %s21, 7
    %p191 = por %p189, %p190
    %p193 = scmp.ne.s32.totalorder %s178, %s192
    %p194 = scmp.eq.s32.totalorder %s21, 0
    %p195 = por %p193, %p194
    %s197 = sadd.s32 %s196, 1
    %p200 = scmp.eq.s32.totalorder %s15, 7
    %p201 = scmp.ne.s32.totalorder %s196, %s198
    %p202 = scmp.eq.s32.totalorder %s15, 0
    %p203 = por %p201, %p202
    %p204 = scmp.ne.s32.totalorder %s196, %s198
    %p205 = scmp.eq.s32.totalorder %s20, 7
    %p206 = por %p204, %p205
    %p207 = scmp.ne.s32.totalorder %s198, %s199
    %p208 = scmp.eq.s32.totalorder %s20, 0
    %p209 = por %p207, %p208
    %p210 = scmp.ne.s32.totalorder %s198, %s199
    %p211 = scmp.eq.s32.totalorder %s21, 7
    %p212 = por %p210, %p211
    %p214 = scmp.ne.s32.totalorder %s199, %s213
    %p215 = scmp.eq.s32.totalorder %s21, 0
    %p216 = por %p214, %p215
    %s217 = ssub.s32 %s15, %s22
    %p218 = scmp.eq.s32.totalorder %s217, 0
    %s220 = sadd.s32 %s219, 1
    %s221 = scalar_select %p218, %s219, %s220
    %p224 = pneg %p218
    %p225 = scmp.eq.s32.totalorder %s15, 7
    %p226 = por %p224, %p225
    %p227 = scmp.ne.s32.totalorder %s219, %s222
    %p228 = scmp.eq.s32.totalorder %s15, 0
    %p229 = por %p227, %p228
    %p230 = scmp.ne.s32.totalorder %s219, %s222
    %p231 = scmp.eq.s32.totalorder %s20, 7
    %p232 = por %p230, %p231
    %p233 = scmp.ne.s32.totalorder %s222, %s223
    %p234 = scmp.eq.s32.totalorder %s20, 0
    %p235 = por %p233, %p234
    %p236 = scmp.ne.s32.totalorder %s222, %s223
    %p237 = scmp.eq.s32.totalorder %s21, 7
    %p238 = por %p236, %p237
    %p240 = scmp.ne.s32.totalorder %s223, %s239
    %p241 = scmp.eq.s32.totalorder %s21, 0
    %p242 = por %p240, %p241
    %p243 = scmp.le.s32.totalorder 1, %s15
    %p244 = scmp.lt.s32.totalorder %s15, 9
    %p245 = pnand %p243, %p244
    %p246 = pneg %p245
    // Predicated region
    $region9: #{policy_forward.1} parent=5 // pred_check
      _
    $region10: #{policy_forward.1} parent=5 // pred_check_branch
      %248 = sbr.rel (%p245) target = $region12
    $region11: #{policy_forward.1} parent=5 // pred_region
      %s249 = ssub.s32 %s15, 1
      // Predicated region
      $region13: #{policy_forward.1} parent=11 // pred_check
        %p250 = pneg %p62
      $region14: #{policy_forward.1} parent=11 // pred_check_branch
        %252 = sbr.rel (%p250) target = $region16
      $region15: #{policy_forward.1} parent=11 // pred_region
        _
      $region16: #{policy_forward.1} parent=11 // pred_fallthru
        _
      // Predicated region
      $region17: #{policy_forward.1} parent=11 // pred_check
        %p253 = pneg %p83
      $region18: #{policy_forward.1} parent=11 // pred_check_branch
        %255 = sbr.rel (%p253) target = $region20
      $region19: #{policy_forward.1} parent=11 // pred_region
        _
      $region20: #{policy_forward.1} parent=11 // pred_fallthru
        _
      // Predicated region
      $region21: #{policy_forward.1} parent=11 // pred_check
        %p256 = pneg %p104
      $region22: #{policy_forward.1} parent=11 // pred_check_branch
        %258 = sbr.rel (%p256) target = $region24
      $region23: #{policy_forward.1} parent=11 // pred_region
        _
      $region24: #{policy_forward.1} parent=11 // pred_fallthru
        _
      // Predicated region
      $region25: #{policy_forward.1} parent=11 // pred_check
        %p259 = pneg %p125
      $region26: #{policy_forward.1} parent=11 // pred_check_branch
        %261 = sbr.rel (%p259) target = $region28
      $region27: #{policy_forward.1} parent=11 // pred_region
        _
      $region28: #{policy_forward.1} parent=11 // pred_fallthru
        _
      // Predicated region
      $region29: #{policy_forward.1} parent=11 // pred_check
        %p262 = pneg %p146
      $region30: #{policy_forward.1} parent=11 // pred_check_branch
        %264 = sbr.rel (%p262) target = $region32
      $region31: #{policy_forward.1} parent=11 // pred_region
        _
      $region32: #{policy_forward.1} parent=11 // pred_fallthru
        _
      // Predicated region
      $region33: #{policy_forward.1} parent=11 // pred_check
        %p265 = pneg %p167
      $region34: #{policy_forward.1} parent=11 // pred_check_branch
        %267 = sbr.rel (%p265) target = $region36
      $region35: #{policy_forward.1} parent=11 // pred_region
        _
      $region36: #{policy_forward.1} parent=11 // pred_fallthru
        _
      // Predicated region
      $region37: #{policy_forward.1} parent=11 // pred_check
        %p268 = pneg %p188
      $region38: #{policy_forward.1} parent=11 // pred_check_branch
        %270 = sbr.rel (%p268) target = $region40
      $region39: #{policy_forward.1} parent=11 // pred_region
        _
      $region40: #{policy_forward.1} parent=11 // pred_fallthru
        _
      // Predicated region
      $region41: #{policy_forward.1} parent=11 // pred_check
        %p271 = pneg %p209
      $region42: #{policy_forward.1} parent=11 // pred_check_branch
        %273 = sbr.rel (%p271) target = $region44
      $region43: #{policy_forward.1} parent=11 // pred_region
        _
      $region44: #{policy_forward.1} parent=11 // pred_fallthru
        _
    $region12: #{policy_forward.1} parent=5 // pred_fallthru
      _
    %p274 = scmp.lt.s32.totalorder %s15, 8
    // Predicated region
    $region45: #{policy_forward.1} parent=5 // pred_check
      %p275 = pneg %p274
    $region46: #{policy_forward.1} parent=5 // pred_check_branch
      %277 = sbr.rel (%p275) target = $region48
    $region47: #{policy_forward.1} parent=5 // pred_region
      // Predicated region
      $region49: #{policy_forward.1} parent=47 // pred_check
        %p278 = pneg %p35
      $region50: #{policy_forward.1} parent=47 // pred_check_branch
        %280 = sbr.rel (%p278) target = $region52
      $region51: #{policy_forward.1} parent=47 // pred_region
        %p281 = scmp.lt.s32.totalorder %s15, 7
        %s282 = scalar_select %p281, %s15, 7
        %s283 = smul.addr %s282, 4
        %s284 = smul.addr %s283, 4
        %s285 = scalar_lea.vmem %s0, %s284
      $region52: #{policy_forward.1} parent=47 // pred_fallthru
        _
    $region48: #{policy_forward.1} parent=5 // pred_fallthru
      _
    %p286 = scmp.le.s32.totalorder 1, %s15
    %p287 = scmp.lt.s32.totalorder %s15, 9
    %p288 = pnand %p286, %p287
    %p289 = pneg %p288
    // Predicated region
    $region53: #{policy_forward.1} parent=5 // pred_check
      _
    $region54: #{policy_forward.1} parent=5 // pred_check_branch
      %291 = sbr.rel (%p288) target = $region56
    $region55: #{policy_forward.1} parent=5 // pred_region
      %s292 = ssub.s32 %s15, 1
      %p293 = scmp.lt.s32.totalorder %s20, 7
      %s294 = scalar_select %p293, %s20, 7
      %s295 = smul.addr %s294, 4
      %s296 = smul.addr %s295, 4
      %s297 = scalar_lea.vmem %s0, %s296
      %p298 = pneg %p41
      %p299 = pneg %p38
      %p300 = pneg %p62
      %p301 = pneg %p59
      %p302 = pneg %p83
      %p303 = pneg %p80
      %p304 = pneg %p104
      %p305 = pneg %p101
      %p306 = pneg %p125
      %p307 = pneg %p122
      %p308 = pneg %p146
      %p309 = pneg %p143
      %p310 = pneg %p167
      %p311 = pneg %p164
      %p312 = pneg %p188
      %p313 = pneg %p185
      %p314 = pneg %p209
      %p315 = pneg %p206
      %p316 = pneg %p235
      %p317 = pneg %p232
      %p318 = scmp.lt.s32.totalorder %s20, 7
      %s319 = scalar_select %p318, %s20, 7
      %s320 = scalar_lea.vmem %s9, %s319
      %p321 = scmp.lt.s32.totalorder %s20, 7
      %s322 = scalar_select %p321, %s20, 7
      %s323 = smul.addr %s322, 4
      %s324 = smul.addr %s323, 4
      %s325 = scalar_lea.vmem %s0, %s324
      %p326 = scmp.lt.s32.totalorder %s20, 7
      %s327 = scalar_select %p326, %s20, 7
      %s328 = scalar_lea.vmem %s9, %s327
      %v330 = vld [vmem:[%s325] sm:$0xf]
      %v331 = vld [vmem:[%s325 + $0x4] sm:$0xf]
      %v332 = vld [vmem:[%s325 + $0x8] sm:$0xf]
      %v333 = vld [vmem:[%s325 + $0xc] sm:$0x7]
      %v334 = vld [vmem:[%s1] sm:$0xf]
      %v335 = vld [vmem:[%s1 + $0x4] sm:$0xf]
      %v336 = vld [vmem:[%s2] sm:$0x1]
      %v338 = vperm.slane %v336, 0
      %v344 = vunpack.c.l.b16 %v330
      %v345 = vunpack.c.l.b16 %v331
      %v346 = vunpack.c.l.b16 %v332
      %v347 = vunpack.c.l.b16 %v333
      %v348 = vpack.c.b16 %v345, %v344
      %v349 = vpack.c.b16 %v347, %v346
      %v352 = vunpack.c.l.b16 %v334
      %v353 = vunpack.c.l.b16 %v335
      %v354 = vpack.c.b16 %v353, %v352
      %vm356 = vcmask 130048
      %v358 = vsel %vm356, %v348, 0
      %v361 = vsel %vm356, %v349, 0
      %363 = vmatpush.bf16.msra.mxu0 0
      %364 = vmatpush.bf16.msra.mxu0 0
      %365 = vmatpush.bf16.msra.mxu0 0
      %366 = vmatpush.bf16.msra.mxu0 0
      %367 = vmatpush.bf16.msra.mxu0 0
      %368 = vmatpush.bf16.msra.mxu0 0
      %369 = vmatpush.bf16.msra.mxu0 0
      %370 = vmatpush.bf16.msra.mxu0 %v354
      %371 = vmatmul.bf16.gmra.mxu0 %v358
      %v372 = vpop.f32.mrf.mxu0
      %v373 = vadd.f32 %v338, %v372
      %v374 = vpop.f32.mrf.mxu0
      %v375 = vadd.f32 %v338, %v374
      %376 = vmatmul.bf16.gmra.mxu0 %v361
      %v377 = vpop.f32.mrf.mxu0
      %v378 = vadd.f32 %v338, %v377
      %v379 = vpop.f32.mrf.mxu0
      %v380 = vadd.f32 %v338, %v379
      %381 = vdwg.mxu0
      %v382 = vmax.f32 %v373, 0.0
      %v383 = vmax.f32 %v375, 0.0
      %v384 = vmax.f32 %v378, 0.0
      %v385 = vmax.f32 %v380, 0.0
      %v386 = vpack.c.bf16 %v383, %v382
      %v387 = vpack.c.bf16 %v385, %v384
      %v388 = vld [vmem:[%s3] sm:$0xf]
      %v389 = vld [vmem:[%s3 + $0x4] sm:$0xf]
      %v390 = vld [vmem:[%s3 + $0x8] sm:$0xf]
      %v391 = vld [vmem:[%s3 + $0xc] sm:$0xf]
      %v396 = vunpack.c.l.b16 %v388
      %v397 = vunpack.c.l.b16 %v389
      %v398 = vunpack.c.l.b16 %v390
      %v399 = vunpack.c.l.b16 %v391
      %v400 = vpack.c.b16 %v397, %v396
      %v401 = vpack.c.b16 %v399, %v398
      %vm404 = vcmask 261120
      %v406 = vsel %vm404, %v386, 0
      %v409 = vsel %vm404, %v387, 0
      %411 = vmatpush.bf16.msra.mxu0 0
      %412 = vmatpush.bf16.msra.mxu0 0
      %413 = vmatpush.bf16.msra.mxu0 0
      %414 = vmatpush.bf16.msra.mxu0 0
      %415 = vmatpush.bf16.msra.mxu0 0
      %416 = vmatpush.bf16.msra.mxu0 0
      %417 = vmatpush.bf16.msra.mxu0 %v401
      %418 = vmatpush.bf16.msra.mxu0 %v400
      %419 = vmatmul.bf16.gmra.mxu0 %v406
      %v420 = vpop.f32.mrf.mxu0
      %v421 = vadd.f32 0.0, %v420
      %v422 = vpop.f32.mrf.mxu0
      %v423 = vadd.f32 0.0, %v422
      %424 = vmatmul.bf16.gmra.mxu0 %v409
      %v425 = vpop.f32.mrf.mxu0
      %v426 = vpop.f32.mrf.mxu0
      %427 = vdwg.mxu0
      %s428 = scalar_lea.vmem %s3, 16
      %v429 = vld [vmem:[%s428] sm:$0xf]
      %v430 = vld [vmem:[%s428 + $0x4] sm:$0xf]
      %v431 = vld [vmem:[%s428 + $0x8] sm:$0xf]
      %v432 = vld [vmem:[%s428 + $0xc] sm:$0xf]
      %v437 = vunpack.c.l.b16 %v429
      %v438 = vunpack.c.l.b16 %v430
      %v439 = vunpack.c.l.b16 %v431
      %v440 = vunpack.c.l.b16 %v432
      %v441 = vpack.c.b16 %v438, %v437
      %v442 = vpack.c.b16 %v440, %v439
      %445 = vmatpush.bf16.msra.mxu0 0
      %446 = vmatpush.bf16.msra.mxu0 0
      %447 = vmatpush.bf16.msra.mxu0 0
      %448 = vmatpush.bf16.msra.mxu0 0
      %449 = vmatpush.bf16.msra.mxu0 0
      %450 = vmatpush.bf16.msra.mxu0 0
      %451 = vmatpush.bf16.msra.mxu0 %v442
      %452 = vmatpush.bf16.msra.mxu0 %v441
      %453 = vmatmul.bf16.gmra.mxu0 %v406
      %v454 = vpop.f32.mrf.mxu0
      %v455 = vadd.f32 0.0, %v454
      %v456 = vpop.f32.mrf.mxu0
      %v457 = vadd.f32 0.0, %v456
      %458 = vmatmul.bf16.gmra.mxu0 %v409
      %v459 = vpop.f32.mrf.mxu0
      %v460 = vadd.f32 0.0, %v459
      %v461 = vpop.f32.mrf.mxu0
      %462 = vdwg.mxu0
      %s463 = scalar_lea.vmem %s3, 32
      %v464 = vld [vmem:[%s463] sm:$0xf]
      %v465 = vld [vmem:[%s463 + $0x4] sm:$0xf]
      %v466 = vld [vmem:[%s463 + $0x8] sm:$0xf]
      %v467 = vld [vmem:[%s463 + $0xc] sm:$0xf]
      %v472 = vunpack.c.l.b16 %v464
      %v473 = vunpack.c.l.b16 %v465
      %v474 = vunpack.c.l.b16 %v466
      %v475 = vunpack.c.l.b16 %v467
      %v476 = vpack.c.b16 %v473, %v472
      %v477 = vpack.c.b16 %v475, %v474
      %480 = vmatpush.bf16.msra.mxu0 0
      %481 = vmatpush.bf16.msra.mxu0 0
      %482 = vmatpush.bf16.msra.mxu0 0
      %483 = vmatpush.bf16.msra.mxu0 0
      %484 = vmatpush.bf16.msra.mxu0 0
      %485 = vmatpush.bf16.msra.mxu0 0
      %486 = vmatpush.bf16.msra.mxu0 %v477
      %487 = vmatpush.bf16.msra.mxu0 %v476
      %488 = vmatmul.bf16.gmra.mxu0 %v406
      %v489 = vpop.f32.mrf.mxu0
      %v490 = vadd.f32 0.0, %v489
      %v491 = vpop.f32.mrf.mxu0
      %v492 = vadd.f32 0.0, %v491
      %493 = vmatmul.bf16.gmra.mxu0 %v409
      %v494 = vpop.f32.mrf.mxu0
      %v495 = vadd.f32 0.0, %v494
      %v496 = vpop.f32.mrf.mxu0
      %497 = vdwg.mxu0
      %s498 = scalar_lea.vmem %s3, 48
      %v499 = vld [vmem:[%s498] sm:$0xf]
      %v500 = vld [vmem:[%s498 + $0x4] sm:$0xf]
      %v501 = vld [vmem:[%s498 + $0x8] sm:$0xf]
      %v502 = vld [vmem:[%s498 + $0xc] sm:$0xf]
      %v507 = vunpack.c.l.b16 %v499
      %v508 = vunpack.c.l.b16 %v500
      %v509 = vunpack.c.l.b16 %v501
      %v510 = vunpack.c.l.b16 %v502
      %v511 = vpack.c.b16 %v508, %v507
      %v512 = vpack.c.b16 %v510, %v509
      %515 = vmatpush.bf16.msra.mxu0 0
      %516 = vmatpush.bf16.msra.mxu0 0
      %517 = vmatpush.bf16.msra.mxu0 0
      %518 = vmatpush.bf16.msra.mxu0 0
      %519 = vmatpush.bf16.msra.mxu0 0
      %520 = vmatpush.bf16.msra.mxu0 0
      %521 = vmatpush.bf16.msra.mxu0 %v512
      %522 = vmatpush.bf16.msra.mxu0 %v511
      %523 = vmatmul.bf16.gmra.mxu0 %v406
      %v524 = vpop.f32.mrf.mxu0
      %v525 = vadd.f32 0.0, %v524
      %v526 = vpop.f32.mrf.mxu0
      %v527 = vadd.f32 0.0, %v526
      %528 = vmatmul.bf16.gmra.mxu0 %v409
      %v529 = vpop.f32.mrf.mxu0
      %v530 = vadd.f32 0.0, %v529
      %v531 = vpop.f32.mrf.mxu0
      %532 = vdwg.mxu0
      %s533 = scalar_lea.vmem %s3, 64
      %v534 = vld [vmem:[%s533] sm:$0xf]
      %v535 = vld [vmem:[%s533 + $0x4] sm:$0xf]
      %v536 = vld [vmem:[%s533 + $0x8] sm:$0xf]
      %v537 = vld [vmem:[%s533 + $0xc] sm:$0xf]
      %v542 = vunpack.c.l.b16 %v534
      %v543 = vunpack.c.l.b16 %v535
      %v544 = vunpack.c.l.b16 %v536
      %v545 = vunpack.c.l.b16 %v537
      %v546 = vpack.c.b16 %v543, %v542
      %v547 = vpack.c.b16 %v545, %v544
      %550 = vmatpush.bf16.msra.mxu0 0
      %551 = vmatpush.bf16.msra.mxu0 0
      %552 = vmatpush.bf16.msra.mxu0 0
      %553 = vmatpush.bf16.msra.mxu0 0
      %554 = vmatpush.bf16.msra.mxu0 0
      %555 = vmatpush.bf16.msra.mxu0 0
      %556 = vmatpush.bf16.msra.mxu0 %v547
      %557 = vmatpush.bf16.msra.mxu0 %v546
      %558 = vmatmul.bf16.gmra.mxu0 %v406
      %v559 = vpop.f32.mrf.mxu0
      %v560 = vadd.f32 0.0, %v559
      %v561 = vpop.f32.mrf.mxu0
      %v562 = vadd.f32 0.0, %v561
      %563 = vmatmul.bf16.gmra.mxu0 %v409
      %v564 = vpop.f32.mrf.mxu0
      %v565 = vadd.f32 0.0, %v564
      %v566 = vpop.f32.mrf.mxu0
      %567 = vdwg.mxu0
      %s568 = scalar_lea.vmem %s3, 80
      %v569 = vld [vmem:[%s568] sm:$0xf]
      %v570 = vld [vmem:[%s568 + $0x4] sm:$0xf]
      %v571 = vld [vmem:[%s568 + $0x8] sm:$0xf]
      %v572 = vld [vmem:[%s568 + $0xc] sm:$0xf]
      %v577 = vunpack.c.l.b16 %v569
      %v578 = vunpack.c.l.b16 %v570
      %v579 = vunpack.c.l.b16 %v571
      %v580 = vunpack.c.l.b16 %v572
      %v581 = vpack.c.b16 %v578, %v577
      %v582 = vpack.c.b16 %v580, %v579
      %585 = vmatpush.bf16.msra.mxu0 0
      %586 = vmatpush.bf16.msra.mxu0 0
      %587 = vmatpush.bf16.msra.mxu0 0
      %588 = vmatpush.bf16.msra.mxu0 0
      %589 = vmatpush.bf16.msra.mxu0 0
      %590 = vmatpush.bf16.msra.mxu0 0
      %591 = vmatpush.bf16.msra.mxu0 %v582
      %592 = vmatpush.bf16.msra.mxu0 %v581
      %593 = vmatmul.bf16.gmra.mxu0 %v406
      %v594 = vpop.f32.mrf.mxu0
      %v595 = vpop.f32.mrf.mxu0
      %v596 = vadd.f32 0.0, %v595
      %597 = vmatmul.bf16.gmra.mxu0 %v409
      %v598 = vpop.f32.mrf.mxu0
      %v599 = vadd.f32 0.0, %v598
      %v600 = vpop.f32.mrf.mxu0
      %601 = vdwg.mxu0
      %s602 = scalar_lea.vmem %s3, 96
      %v603 = vld [vmem:[%s602] sm:$0xf]
      %v604 = vld [vmem:[%s602 + $0x4] sm:$0xf]
      %v605 = vld [vmem:[%s602 + $0x8] sm:$0xf]
      %v606 = vld [vmem:[%s602 + $0xc] sm:$0xf]
      %v611 = vunpack.c.l.b16 %v603
      %v612 = vunpack.c.l.b16 %v604
      %v613 = vunpack.c.l.b16 %v605
      %v614 = vunpack.c.l.b16 %v606
      %v615 = vpack.c.b16 %v612, %v611
      %v616 = vpack.c.b16 %v614, %v613
      %619 = vmatpush.bf16.msra.mxu0 0
      %620 = vmatpush.bf16.msra.mxu0 0
      %621 = vmatpush.bf16.msra.mxu0 0
      %622 = vmatpush.bf16.msra.mxu0 0
      %623 = vmatpush.bf16.msra.mxu0 0
      %624 = vmatpush.bf16.msra.mxu0 0
      %625 = vmatpush.bf16.msra.mxu0 %v616
      %626 = vmatpush.bf16.msra.mxu0 %v615
      %627 = vmatmul.bf16.gmra.mxu0 %v406
      %v628 = vpop.f32.mrf.mxu0
      %v629 = vpop.f32.mrf.mxu0
      %v630 = vadd.f32 0.0, %v629
      %631 = vmatmul.bf16.gmra.mxu0 %v409
      %v632 = vpop.f32.mrf.mxu0
      %v633 = vadd.f32 0.0, %v632
      %v634 = vpop.f32.mrf.mxu0
      %v635 = vadd.f32 0.0, %v634
      %636 = vdwg.mxu0
      %s637 = scalar_lea.vmem %s3, 112
      %v638 = vld [vmem:[%s637] sm:$0xf]
      %v639 = vld [vmem:[%s637 + $0x4] sm:$0xf]
      %v640 = vld [vmem:[%s637 + $0x8] sm:$0xf]
      %v641 = vld [vmem:[%s637 + $0xc] sm:$0xf]
      %v646 = vunpack.c.l.b16 %v638
      %v647 = vunpack.c.l.b16 %v639
      %v648 = vunpack.c.l.b16 %v640
      %v649 = vunpack.c.l.b16 %v641
      %v650 = vpack.c.b16 %v647, %v646
      %v651 = vpack.c.b16 %v649, %v648
      %654 = vmatpush.bf16.msra.mxu0 0
      %655 = vmatpush.bf16.msra.mxu0 0
      %656 = vmatpush.bf16.msra.mxu0 0
      %657 = vmatpush.bf16.msra.mxu0 0
      %658 = vmatpush.bf16.msra.mxu0 0
      %659 = vmatpush.bf16.msra.mxu0 0
      %660 = vmatpush.bf16.msra.mxu0 %v651
      %661 = vmatpush.bf16.msra.mxu0 %v650
      %662 = vmatmul.bf16.gmra.mxu0 %v406
      %v663 = vpop.f32.mrf.mxu0
      %v664 = vpop.f32.mrf.mxu0
      %v665 = vadd.f32 0.0, %v664
      %666 = vmatmul.bf16.gmra.mxu0 %v409
      %v667 = vpop.f32.mrf.mxu0
      %v668 = vadd.f32 0.0, %v667
      %v669 = vpop.f32.mrf.mxu0
      %v670 = vadd.f32 0.0, %v669
      %671 = vdwg.mxu0
      %s672 = scalar_lea.vmem %s3, 128
      %v673 = vld [vmem:[%s672] sm:$0xf]
      %v674 = vld [vmem:[%s672 + $0x4] sm:$0xf]
      %v675 = vld [vmem:[%s672 + $0x8] sm:$0xf]
      %v676 = vld [vmem:[%s672 + $0xc] sm:$0xf]
      %v681 = vunpack.c.l.b16 %v673
      %v682 = vunpack.c.l.b16 %v674
      %v683 = vunpack.c.l.b16 %v675
      %v684 = vunpack.c.l.b16 %v676
      %v685 = vpack.c.b16 %v682, %v681
      %v686 = vpack.c.b16 %v684, %v683
      %689 = vmatpush.bf16.msra.mxu0 0
      %690 = vmatpush.bf16.msra.mxu0 0
      %691 = vmatpush.bf16.msra.mxu0 0
      %692 = vmatpush.bf16.msra.mxu0 0
      %693 = vmatpush.bf16.msra.mxu0 0
      %694 = vmatpush.bf16.msra.mxu0 0
      %695 = vmatpush.bf16.msra.mxu0 %v686
      %696 = vmatpush.bf16.msra.mxu0 %v685
      %697 = vmatmul.bf16.gmra.mxu0 %v406
      %v698 = vpop.f32.mrf.mxu0
      %v699 = vpop.f32.mrf.mxu0
      %v700 = vadd.f32 0.0, %v699
      %701 = vmatmul.bf16.gmra.mxu0 %v409
      %v702 = vpop.f32.mrf.mxu0
      %v703 = vadd.f32 0.0, %v702
      %v704 = vpop.f32.mrf.mxu0
      %v705 = vadd.f32 0.0, %v704
      %706 = vdwg.mxu0
      %v708 = vrot.slane %v455, 1
      %v710 = vadd.f32 %v421, %v708
      %vm713 = vcmask 1043456
      %v714 = vrot.slane %v525, 4
      %v715 = vrot.slane %v527, 4
      %v716 = vsel %vm713, %v714, %v715
      %v718 = vadd.f32 %v490, %v716
      %v720 = vrot.slane %v596, 1
      %v722 = vadd.f32 %v560, %v720
      %v723 = vadd.f32 %v562, %v720
      %vm726 = vcmask 1046528
      %v727 = vrot.slane %v665, 1
      %v728 = vrot.slane %v668, 1
      %v729 = vsel %vm726, %v727, %v728
      %v731 = vadd.f32 %v630, %v729
      %v733 = vrot.slane %v718, 2
      %v735 = vadd.f32 %v710, %v733
      %v737 = vrot.slane %v731, 5
      %v739 = vadd.f32 %v722, %v737
      %v740 = vadd.f32 %v723, %v737
      %vm743 = vcmask 1040384
      %v744 = vrot.slane %v739, 7
      %v745 = vrot.slane %v740, 7
      %v746 = vsel %vm743, %v744, %v745
      %v748 = vadd.f32 %v735, %v746
      %vm751 = vcmask 1041408
      %v752 = vrot.slane %v700, 6
      %v753 = vrot.slane %v703, 6
      %v754 = vsel %vm751, %v752, %v753
      %v756 = vadd.f32 %v748, %v754
      %v757 = vld [vmem:[%s4] sm:$0x1]
      %v759 = vperm.slane %v757, 0
      %v761 = vadd.f32 %v756, %v759
      %v762 = vmax.f32 %v761, 0.0
      %v763 = vpack.c.bf16 %v762, %v762
      %v764 = vld [vmem:[%s5] sm:$0xff]
      %v765 = vld [vmem:[%s5 + $0x8] sm:$0xff]
      %v766 = vld [vmem:[%s5 + $0x10] sm:$0xff]
      %v767 = vld [vmem:[%s5 + $0x18] sm:$0xff]
      %v768 = vld [vmem:[%s5 + $0x20] sm:$0xff]
      %v769 = vld [vmem:[%s5 + $0x28] sm:$0xff]
      %v770 = vld [vmem:[%s5 + $0x30] sm:$0xff]
      %v771 = vld [vmem:[%s5 + $0x38] sm:$0xff]
      %v772 = vld [vmem:[%s5 + $0x40] sm:$0xff]
      %v773 = vld [vmem:[%s5 + $0x48] sm:$0xff]
      %v774 = vld [vmem:[%s5 + $0x50] sm:$0xff]
      %v775 = vld [vmem:[%s5 + $0x58] sm:$0xff]
      %v776 = vld [vmem:[%s5 + $0x60] sm:$0xff]
      %v777 = vld [vmem:[%s5 + $0x68] sm:$0xff]
      %v778 = vld [vmem:[%s5 + $0x70] sm:$0xff]
      %v779 = vld [vmem:[%s5 + $0x78] sm:$0xff]
      %s780 = scalar_lea.vmem %s5, 128
      %v781 = vld [vmem:[%s780] sm:$0xff]
      %v782 = vld [vmem:[%s780 + $0x8] sm:$0xff]
      %v783 = vld [vmem:[%s780 + $0x10] sm:$0xff]
      %v784 = vld [vmem:[%s780 + $0x18] sm:$0xff]
      %v785 = vld [vmem:[%s780 + $0x20] sm:$0xff]
      %v786 = vld [vmem:[%s780 + $0x28] sm:$0xff]
      %v787 = vld [vmem:[%s780 + $0x30] sm:$0xff]
      %v788 = vld [vmem:[%s780 + $0x38] sm:$0xff]
      %v789 = vld [vmem:[%s780 + $0x40] sm:$0xff]
      %v790 = vld [vmem:[%s780 + $0x48] sm:$0xff]
      %v791 = vld [vmem:[%s780 + $0x50] sm:$0xff]
      %v792 = vld [vmem:[%s780 + $0x58] sm:$0xff]
      %v793 = vld [vmem:[%s780 + $0x60] sm:$0xff]
      %v794 = vld [vmem:[%s780 + $0x68] sm:$0xff]
      %v795 = vld [vmem:[%s780 + $0x70] sm:$0xff]
      %v796 = vld [vmem:[%s780 + $0x78] sm:$0xff]
      %v798 = vshrl.u32 %v763, 16
      %v816 = vunpack.c.l.b16 %v781
      %v817 = vunpack.c.h.b16 %v781
      %v818 = vunpack.c.l.b16 %v782
      %v819 = vunpack.c.h.b16 %v782
      %v820 = vunpack.c.l.b16 %v783
      %v821 = vunpack.c.h.b16 %v783
      %v822 = vunpack.c.l.b16 %v784
      %v823 = vunpack.c.h.b16 %v784
      %v824 = vunpack.c.l.b16 %v785
      %v825 = vunpack.c.h.b16 %v785
      %v826 = vunpack.c.l.b16 %v786
      %v827 = vunpack.c.h.b16 %v786
      %v828 = vunpack.c.l.b16 %v787
      %v829 = vunpack.c.h.b16 %v787
      %v830 = vunpack.c.l.b16 %v788
      %v831 = vunpack.c.h.b16 %v788
      %v832 = vunpack.c.l.b16 %v789
      %v833 = vunpack.c.h.b16 %v789
      %v834 = vunpack.c.l.b16 %v790
      %v835 = vunpack.c.h.b16 %v790
      %v836 = vunpack.c.l.b16 %v791
      %v837 = vunpack.c.h.b16 %v791
      %v838 = vunpack.c.l.b16 %v792
      %v839 = vunpack.c.h.b16 %v792
      %v840 = vunpack.c.l.b16 %v793
      %v841 = vunpack.c.h.b16 %v793
      %v842 = vunpack.c.l.b16 %v794
      %v843 = vunpack.c.h.b16 %v794
      %v844 = vunpack.c.l.b16 %v795
      %v845 = vunpack.c.h.b16 %v795
      %v846 = vunpack.c.l.b16 %v796
      %v847 = vunpack.c.h.b16 %v796
      %v848 = vpack.c.b16 %v820, %v816
      %v849 = vpack.c.b16 %v821, %v817
      %v850 = vpack.c.b16 %v822, %v818
      %v851 = vpack.c.b16 %v823, %v819
      %v852 = vpack.c.b16 %v828, %v824
      %v853 = vpack.c.b16 %v829, %v825
      %v854 = vpack.c.b16 %v830, %v826
      %v855 = vpack.c.b16 %v831, %v827
      %v856 = vpack.c.b16 %v836, %v832
      %v857 = vpack.c.b16 %v837, %v833
      %v858 = vpack.c.b16 %v838, %v834
      %v859 = vpack.c.b16 %v839, %v835
      %v860 = vpack.c.b16 %v844, %v840
      %v861 = vpack.c.b16 %v845, %v841
      %v862 = vpack.c.b16 %v846, %v842
      %v863 = vpack.c.b16 %v847, %v843
      %vm880 = vcmask 523264
      %v882 = vsel %vm880, %v798, 0
      %884 = vmatpush.bf16.msra.mxu0 0
      %885 = vmatpush.bf16.msra.mxu0 0
      %886 = vmatpush.bf16.msra.mxu0 0
      %887 = vmatpush.bf16.msra.mxu0 0
      %888 = vmatpush.bf16.msra.mxu0 %v860
      %889 = vmatpush.bf16.msra.mxu0 %v856
      %890 = vmatpush.bf16.msra.mxu0 %v852
      %891 = vmatpush.bf16.msra.mxu0 %v848
      %892 = vmatmul.bf16.gmra.mxu0 %v882
      %v893 = vpop.f32.mrf.mxu0
      %v894 = vadd.f32 0.0, %v893
      %v895 = vpop.f32.mrf.mxu0
      %896 = vdwg.mxu0
      %897 = vmatpush.bf16.msra.mxu0 0
      %898 = vmatpush.bf16.msra.mxu0 0
      %899 = vmatpush.bf16.msra.mxu0 0
      %900 = vmatpush.bf16.msra.mxu0 0
      %901 = vmatpush.bf16.msra.mxu0 %v861
      %902 = vmatpush.bf16.msra.mxu0 %v857
      %903 = vmatpush.bf16.msra.mxu0 %v853
      %904 = vmatpush.bf16.msra.mxu0 %v849
      %905 = vmatmul.bf16.gmra.mxu0 %v882
      %v906 = vpop.f32.mrf.mxu0
      %v907 = vadd.f32 0.0, %v906
      %v908 = vpop.f32.mrf.mxu0
      %909 = vdwg.mxu0
      %910 = vmatpush.bf16.msra.mxu0 0
      %911 = vmatpush.bf16.msra.mxu0 0
      %912 = vmatpush.bf16.msra.mxu0 0
      %913 = vmatpush.bf16.msra.mxu0 0
      %914 = vmatpush.bf16.msra.mxu0 %v862
      %915 = vmatpush.bf16.msra.mxu0 %v858
      %916 = vmatpush.bf16.msra.mxu0 %v854
      %917 = vmatpush.bf16.msra.mxu0 %v850
      %918 = vmatmul.bf16.gmra.mxu0 %v882
      %v919 = vpop.f32.mrf.mxu0
      %v920 = vadd.f32 0.0, %v919
      %v921 = vpop.f32.mrf.mxu0
      %922 = vdwg.mxu0
      %923 = vmatpush.bf16.msra.mxu0 0
      %924 = vmatpush.bf16.msra.mxu0 0
      %925 = vmatpush.bf16.msra.mxu0 0
      %926 = vmatpush.bf16.msra.mxu0 0
      %927 = vmatpush.bf16.msra.mxu0 %v863
      %928 = vmatpush.bf16.msra.mxu0 %v859
      %929 = vmatpush.bf16.msra.mxu0 %v855
      %930 = vmatpush.bf16.msra.mxu0 %v851
      %931 = vmatmul.bf16.gmra.mxu0 %v882
      %v932 = vpop.f32.mrf.mxu0
      %v933 = vadd.f32 0.0, %v932
      %v934 = vpop.f32.mrf.mxu0
      %935 = vdwg.mxu0
      %s936 = scalar_lea.vmem %s5, 256
      %v937 = vld [vmem:[%s936] sm:$0xff]
      %v938 = vld [vmem:[%s936 + $0x8] sm:$0xff]
      %v939 = vld [vmem:[%s936 + $0x10] sm:$0xff]
      %v940 = vld [vmem:[%s936 + $0x18] sm:$0xff]
      %v941 = vld [vmem:[%s936 + $0x20] sm:$0xff]
      %v942 = vld [vmem:[%s936 + $0x28] sm:$0xff]
      %v943 = vld [vmem:[%s936 + $0x30] sm:$0xff]
      %v944 = vld [vmem:[%s936 + $0x38] sm:$0xff]
      %v945 = vld [vmem:[%s936 + $0x40] sm:$0xff]
      %v946 = vld [vmem:[%s936 + $0x48] sm:$0xff]
      %v947 = vld [vmem:[%s936 + $0x50] sm:$0xff]
      %v948 = vld [vmem:[%s936 + $0x58] sm:$0xff]
      %v949 = vld [vmem:[%s936 + $0x60] sm:$0xff]
      %v950 = vld [vmem:[%s936 + $0x68] sm:$0xff]
      %v951 = vld [vmem:[%s936 + $0x70] sm:$0xff]
      %v952 = vld [vmem:[%s936 + $0x78] sm:$0xff]
      %s953 = scalar_lea.vmem %s5, 384
      %v954 = vld [vmem:[%s953] sm:$0xff]
      %v955 = vld [vmem:[%s953 + $0x8] sm:$0xff]
      %v956 = vld [vmem:[%s953 + $0x10] sm:$0xff]
      %v957 = vld [vmem:[%s953 + $0x18] sm:$0xff]
      %v958 = vld [vmem:[%s953 + $0x20] sm:$0xff]
      %v959 = vld [vmem:[%s953 + $0x28] sm:$0xff]
      %v960 = vld [vmem:[%s953 + $0x30] sm:$0xff]
      %v961 = vld [vmem:[%s953 + $0x38] sm:$0xff]
      %v962 = vld [vmem:[%s953 + $0x40] sm:$0xff]
      %v963 = vld [vmem:[%s953 + $0x48] sm:$0xff]
      %v964 = vld [vmem:[%s953 + $0x50] sm:$0xff]
      %v965 = vld [vmem:[%s953 + $0x58] sm:$0xff]
      %v966 = vld [vmem:[%s953 + $0x60] sm:$0xff]
      %v967 = vld [vmem:[%s953 + $0x68] sm:$0xff]
      %v968 = vld [vmem:[%s953 + $0x70] sm:$0xff]
      %v969 = vld [vmem:[%s953 + $0x78] sm:$0xff]
      %v970 = vrot.slane %v798, 1
      %v987 = vunpack.c.l.b16 %v954
      %v988 = vunpack.c.h.b16 %v954
      %v989 = vunpack.c.l.b16 %v955
      %v990 = vunpack.c.h.b16 %v955
      %v991 = vunpack.c.l.b16 %v956
      %v992 = vunpack.c.h.b16 %v956
      %v993 = vunpack.c.l.b16 %v957
      %v994 = vunpack.c.h.b16 %v957
      %v995 = vunpack.c.l.b16 %v958
      %v996 = vunpack.c.h.b16 %v958
      %v997 = vunpack.c.l.b16 %v959
      %v998 = vunpack.c.h.b16 %v959
      %v999 = vunpack.c.l.b16 %v960
      %v1000 = vunpack.c.h.b16 %v960
      %v1001 = vunpack.c.l.b16 %v961
      %v1002 = vunpack.c.h.b16 %v961
      %v1003 = vunpack.c.l.b16 %v962
      %v1004 = vunpack.c.h.b16 %v962
      %v1005 = vunpack.c.l.b16 %v963
      %v1006 = vunpack.c.h.b16 %v963
      %v1007 = vunpack.c.l.b16 %v964
      %v1008 = vunpack.c.h.b16 %v964
      %v1009 = vunpack.c.l.b16 %v965
      %v1010 = vunpack.c.h.b16 %v965
      %v1011 = vunpack.c.l.b16 %v966
      %v1012 = vunpack.c.h.b16 %v966
      %v1013 = vunpack.c.l.b16 %v967
      %v1014 = vunpack.c.h.b16 %v967
      %v1015 = vunpack.c.l.b16 %v968
      %v1016 = vunpack.c.h.b16 %v968
      %v1017 = vunpack.c.l.b16 %v969
      %v1018 = vunpack.c.h.b16 %v969
      %v1019 = vpack.c.b16 %v991, %v987
      %v1020 = vpack.c.b16 %v992, %v988
      %v1021 = vpack.c.b16 %v993, %v989
      %v1022 = vpack.c.b16 %v994, %v990
      %v1023 = vpack.c.b16 %v999, %v995
      %v1024 = vpack.c.b16 %v1000, %v996
      %v1025 = vpack.c.b16 %v1001, %v997
      %v1026 = vpack.c.b16 %v1002, %v998
      %v1027 = vpack.c.b16 %v1007, %v1003
      %v1028 = vpack.c.b16 %v1008, %v1004
      %v1029 = vpack.c.b16 %v1009, %v1005
      %v1030 = vpack.c.b16 %v1010, %v1006
      %v1031 = vpack.c.b16 %v1015, %v1011
      %v1032 = vpack.c.b16 %v1016, %v1012
      %v1033 = vpack.c.b16 %v1017, %v1013
      %v1034 = vpack.c.b16 %v1018, %v1014
      %v1052 = vsel %vm880, %v970, 0
      %1054 = vmatpush.bf16.msra.mxu0 0
      %1055 = vmatpush.bf16.msra.mxu0 0
      %1056 = vmatpush.bf16.msra.mxu0 0
      %1057 = vmatpush.bf16.msra.mxu0 0
      %1058 = vmatpush.bf16.msra.mxu0 %v1031
      %1059 = vmatpush.bf16.msra.mxu0 %v1027
      %1060 = vmatpush.bf16.msra.mxu0 %v1023
      %1061 = vmatpush.bf16.msra.mxu0 %v1019
      %1062 = vmatmul.bf16.gmra.mxu0 %v1052
      %v1063 = vpop.f32.mrf.mxu0
      %v1064 = vadd.f32 0.0, %v1063
      %v1065 = vpop.f32.mrf.mxu0
      %1066 = vdwg.mxu0
      %1067 = vmatpush.bf16.msra.mxu0 0
      %1068 = vmatpush.bf16.msra.mxu0 0
      %1069 = vmatpush.bf16.msra.mxu0 0
      %1070 = vmatpush.bf16.msra.mxu0 0
      %1071 = vmatpush.bf16.msra.mxu0 %v1032
      %1072 = vmatpush.bf16.msra.mxu0 %v1028
      %1073 = vmatpush.bf16.msra.mxu0 %v1024
      %1074 = vmatpush.bf16.msra.mxu0 %v1020
      %1075 = vmatmul.bf16.gmra.mxu0 %v1052
      %v1076 = vpop.f32.mrf.mxu0
      %v1077 = vadd.f32 0.0, %v1076
      %v1078 = vpop.f32.mrf.mxu0
      %1079 = vdwg.mxu0
      %1080 = vmatpush.bf16.msra.mxu0 0
      %1081 = vmatpush.bf16.msra.mxu0 0
      %1082 = vmatpush.bf16.msra.mxu0 0
      %1083 = vmatpush.bf16.msra.mxu0 0
      %1084 = vmatpush.bf16.msra.mxu0 %v1033
      %1085 = vmatpush.bf16.msra.mxu0 %v1029
      %1086 = vmatpush.bf16.msra.mxu0 %v1025
      %1087 = vmatpush.bf16.msra.mxu0 %v1021
      %1088 = vmatmul.bf16.gmra.mxu0 %v1052
      %v1089 = vpop.f32.mrf.mxu0
      %v1090 = vadd.f32 0.0, %v1089
      %v1091 = vpop.f32.mrf.mxu0
      %1092 = vdwg.mxu0
      %1093 = vmatpush.bf16.msra.mxu0 0
      %1094 = vmatpush.bf16.msra.mxu0 0
      %1095 = vmatpush.bf16.msra.mxu0 0
      %1096 = vmatpush.bf16.msra.mxu0 0
      %1097 = vmatpush.bf16.msra.mxu0 %v1034
      %1098 = vmatpush.bf16.msra.mxu0 %v1030
      %1099 = vmatpush.bf16.msra.mxu0 %v1026
      %1100 = vmatpush.bf16.msra.mxu0 %v1022
      %1101 = vmatmul.bf16.gmra.mxu0 %v1052
      %v1102 = vpop.f32.mrf.mxu0
      %v1103 = vadd.f32 0.0, %v1102
      %v1104 = vpop.f32.mrf.mxu0
      %1105 = vdwg.mxu0
      %v1107 = vrot.slane %v457, 1
      %v1108 = vsel %vm726, %v708, %v1107
      %v1111 = vadd.f32 %v421, %v1108
      %v1112 = vadd.f32 %v423, %v1107
      %v1114 = vadd.f32 %v492, %v715
      %v1116 = vrot.slane %v599, 1
      %v1117 = vsel %vm726, %v720, %v1116
      %v1120 = vadd.f32 %v562, %v1117
      %v1121 = vadd.f32 %v565, %v1116
      %v1123 = vadd.f32 %v633, %v728
      %v1125 = vrot.slane %v1114, 2
      %v1127 = vadd.f32 %v1111, %v1125
      %v1128 = vadd.f32 %v1112, %v1125
      %v1130 = vrot.slane %v1123, 5
      %v1132 = vadd.f32 %v1120, %v1130
      %v1133 = vadd.f32 %v1121, %v1130
      %v1136 = vrot.slane %v1132, 7
      %v1137 = vrot.slane %v1133, 7
      %v1138 = vsel %vm743, %v1136, %v1137
      %v1141 = vadd.f32 %v1127, %v1136
      %v1142 = vadd.f32 %v1128, %v1138
      %v1144 = vadd.f32 %v1141, %v753
      %v1145 = vadd.f32 %v1142, %v753
      %v1146 = vadd.f32 %v1144, %v759
      %v1147 = vadd.f32 %v1145, %v759
      %v1148 = vmax.f32 %v1146, 0.0
      %v1149 = vmax.f32 %v1147, 0.0
      %v1150 = vpack.c.bf16 %v1148, %v1148
      %s1151 = scalar_lea.vmem %s5, 512
      %v1152 = vld [vmem:[%s1151] sm:$0xff]
      %v1153 = vld [vmem:[%s1151 + $0x8] sm:$0xff]
      %v1154 = vld [vmem:[%s1151 + $0x10] sm:$0xff]
      %v1155 = vld [vmem:[%s1151 + $0x18] sm:$0xff]
      %v1156 = vld [vmem:[%s1151 + $0x20] sm:$0xff]
      %v1157 = vld [vmem:[%s1151 + $0x28] sm:$0xff]
      %v1158 = vld [vmem:[%s1151 + $0x30] sm:$0xff]
      %v1159 = vld [vmem:[%s1151 + $0x38] sm:$0xff]
      %v1160 = vld [vmem:[%s1151 + $0x40] sm:$0xff]
      %v1161 = vld [vmem:[%s1151 + $0x48] sm:$0xff]
      %v1162 = vld [vmem:[%s1151 + $0x50] sm:$0xff]
      %v1163 = vld [vmem:[%s1151 + $0x58] sm:$0xff]
      %v1164 = vld [vmem:[%s1151 + $0x60] sm:$0xff]
      %v1165 = vld [vmem:[%s1151 + $0x68] sm:$0xff]
      %v1166 = vld [vmem:[%s1151 + $0x70] sm:$0xff]
      %v1167 = vld [vmem:[%s1151 + $0x78] sm:$0xff]
      %s1168 = scalar_lea.vmem %s5, 640
      %v1169 = vld [vmem:[%s1168] sm:$0xff]
      %v1170 = vld [vmem:[%s1168 + $0x8] sm:$0xff]
      %v1171 = vld [vmem:[%s1168 + $0x10] sm:$0xff]
      %v1172 = vld [vmem:[%s1168 + $0x18] sm:$0xff]
      %v1173 = vld [vmem:[%s1168 + $0x20] sm:$0xff]
      %v1174 = vld [vmem:[%s1168 + $0x28] sm:$0xff]
      %v1175 = vld [vmem:[%s1168 + $0x30] sm:$0xff]
      %v1176 = vld [vmem:[%s1168 + $0x38] sm:$0xff]
      %v1177 = vld [vmem:[%s1168 + $0x40] sm:$0xff]
      %v1178 = vld [vmem:[%s1168 + $0x48] sm:$0xff]
      %v1179 = vld [vmem:[%s1168 + $0x50] sm:$0xff]
      %v1180 = vld [vmem:[%s1168 + $0x58] sm:$0xff]
      %v1181 = vld [vmem:[%s1168 + $0x60] sm:$0xff]
      %v1182 = vld [vmem:[%s1168 + $0x68] sm:$0xff]
      %v1183 = vld [vmem:[%s1168 + $0x70] sm:$0xff]
      %v1184 = vld [vmem:[%s1168 + $0x78] sm:$0xff]
      %v1186 = vshrl.u32 %v1150, 16
      %v1188 = vrot.slane %v1186, 3
      %v1205 = vunpack.c.l.b16 %v1169
      %v1206 = vunpack.c.h.b16 %v1169
      %v1207 = vunpack.c.l.b16 %v1170
      %v1208 = vunpack.c.h.b16 %v1170
      %v1209 = vunpack.c.l.b16 %v1171
      %v1210 = vunpack.c.h.b16 %v1171
      %v1211 = vunpack.c.l.b16 %v1172
      %v1212 = vunpack.c.h.b16 %v1172
      %v1213 = vunpack.c.l.b16 %v1173
      %v1214 = vunpack.c.h.b16 %v1173
      %v1215 = vunpack.c.l.b16 %v1174
      %v1216 = vunpack.c.h.b16 %v1174
      %v1217 = vunpack.c.l.b16 %v1175
      %v1218 = vunpack.c.h.b16 %v1175
      %v1219 = vunpack.c.l.b16 %v1176
      %v1220 = vunpack.c.h.b16 %v1176
      %v1221 = vunpack.c.l.b16 %v1177
      %v1222 = vunpack.c.h.b16 %v1177
      %v1223 = vunpack.c.l.b16 %v1178
      %v1224 = vunpack.c.h.b16 %v1178
      %v1225 = vunpack.c.l.b16 %v1179
      %v1226 = vunpack.c.h.b16 %v1179
      %v1227 = vunpack.c.l.b16 %v1180
      %v1228 = vunpack.c.h.b16 %v1180
      %v1229 = vunpack.c.l.b16 %v1181
      %v1230 = vunpack.c.h.b16 %v1181
      %v1231 = vunpack.c.l.b16 %v1182
      %v1232 = vunpack.c.h.b16 %v1182
      %v1233 = vunpack.c.l.b16 %v1183
      %v1234 = vunpack.c.h.b16 %v1183
      %v1235 = vunpack.c.l.b16 %v1184
      %v1236 = vunpack.c.h.b16 %v1184
      %v1237 = vpack.c.b16 %v1209, %v1205
      %v1238 = vpack.c.b16 %v1210, %v1206
      %v1239 = vpack.c.b16 %v1211, %v1207
      %v1240 = vpack.c.b16 %v1212, %v1208
      %v1241 = vpack.c.b16 %v1217, %v1213
      %v1242 = vpack.c.b16 %v1218, %v1214
      %v1243 = vpack.c.b16 %v1219, %v1215
      %v1244 = vpack.c.b16 %v1220, %v1216
      %v1245 = vpack.c.b16 %v1225, %v1221
      %v1246 = vpack.c.b16 %v1226, %v1222
      %v1247 = vpack.c.b16 %v1227, %v1223
      %v1248 = vpack.c.b16 %v1228, %v1224
      %v1249 = vpack.c.b16 %v1233, %v1229
      %v1250 = vpack.c.b16 %v1234, %v1230
      %v1251 = vpack.c.b16 %v1235, %v1231
      %v1252 = vpack.c.b16 %v1236, %v1232
      %v1270 = vsel %vm880, %v1188, 0
      %1272 = vmatpush.bf16.msra.mxu0 0
      %1273 = vmatpush.bf16.msra.mxu0 0
      %1274 = vmatpush.bf16.msra.mxu0 0
      %1275 = vmatpush.bf16.msra.mxu0 0
      %1276 = vmatpush.bf16.msra.mxu0 %v1249
      %1277 = vmatpush.bf16.msra.mxu0 %v1245
      %1278 = vmatpush.bf16.msra.mxu0 %v1241
      %1279 = vmatpush.bf16.msra.mxu0 %v1237
      %1280 = vmatmul.bf16.gmra.mxu0 %v1270
      %v1281 = vpop.f32.mrf.mxu0
      %v1282 = vadd.f32 0.0, %v1281
      %v1283 = vpop.f32.mrf.mxu0
      %1284 = vdwg.mxu0
      %1285 = vmatpush.bf16.msra.mxu0 0
      %1286 = vmatpush.bf16.msra.mxu0 0
      %1287 = vmatpush.bf16.msra.mxu0 0
      %1288 = vmatpush.bf16.msra.mxu0 0
      %1289 = vmatpush.bf16.msra.mxu0 %v1250
      %1290 = vmatpush.bf16.msra.mxu0 %v1246
      %1291 = vmatpush.bf16.msra.mxu0 %v1242
      %1292 = vmatpush.bf16.msra.mxu0 %v1238
      %1293 = vmatmul.bf16.gmra.mxu0 %v1270
      %v1294 = vpop.f32.mrf.mxu0
      %v1295 = vadd.f32 0.0, %v1294
      %v1296 = vpop.f32.mrf.mxu0
      %1297 = vdwg.mxu0
      %1298 = vmatpush.bf16.msra.mxu0 0
      %1299 = vmatpush.bf16.msra.mxu0 0
      %1300 = vmatpush.bf16.msra.mxu0 0
      %1301 = vmatpush.bf16.msra.mxu0 0
      %1302 = vmatpush.bf16.msra.mxu0 %v1251
      %1303 = vmatpush.bf16.msra.mxu0 %v1247
      %1304 = vmatpush.bf16.msra.mxu0 %v1243
      %1305 = vmatpush.bf16.msra.mxu0 %v1239
      %1306 = vmatmul.bf16.gmra.mxu0 %v1270
      %v1307 = vpop.f32.mrf.mxu0
      %v1308 = vadd.f32 0.0, %v1307
      %v1309 = vpop.f32.mrf.mxu0
      %1310 = vdwg.mxu0
      %1311 = vmatpush.bf16.msra.mxu0 0
      %1312 = vmatpush.bf16.msra.mxu0 0
      %1313 = vmatpush.bf16.msra.mxu0 0
      %1314 = vmatpush.bf16.msra.mxu0 0
      %1315 = vmatpush.bf16.msra.mxu0 %v1252
      %1316 = vmatpush.bf16.msra.mxu0 %v1248
      %1317 = vmatpush.bf16.msra.mxu0 %v1244
      %1318 = vmatpush.bf16.msra.mxu0 %v1240
      %1319 = vmatmul.bf16.gmra.mxu0 %v1270
      %v1320 = vpop.f32.mrf.mxu0
      %v1321 = vadd.f32 0.0, %v1320
      %v1322 = vpop.f32.mrf.mxu0
      %1323 = vdwg.mxu0
      %v1324 = vpack.c.bf16 %v1149, %v1149
      %s1325 = scalar_lea.vmem %s5, 768
      %v1326 = vld [vmem:[%s1325] sm:$0xff]
      %v1327 = vld [vmem:[%s1325 + $0x8] sm:$0xff]
      %v1328 = vld [vmem:[%s1325 + $0x10] sm:$0xff]
      %v1329 = vld [vmem:[%s1325 + $0x18] sm:$0xff]
      %v1330 = vld [vmem:[%s1325 + $0x20] sm:$0xff]
      %v1331 = vld [vmem:[%s1325 + $0x28] sm:$0xff]
      %v1332 = vld [vmem:[%s1325 + $0x30] sm:$0xff]
      %v1333 = vld [vmem:[%s1325 + $0x38] sm:$0xff]
      %v1334 = vld [vmem:[%s1325 + $0x40] sm:$0xff]
      %v1335 = vld [vmem:[%s1325 + $0x48] sm:$0xff]
      %v1336 = vld [vmem:[%s1325 + $0x50] sm:$0xff]
      %v1337 = vld [vmem:[%s1325 + $0x58] sm:$0xff]
      %v1338 = vld [vmem:[%s1325 + $0x60] sm:$0xff]
      %v1339 = vld [vmem:[%s1325 + $0x68] sm:$0xff]
      %v1340 = vld [vmem:[%s1325 + $0x70] sm:$0xff]
      %v1341 = vld [vmem:[%s1325 + $0x78] sm:$0xff]
      %s1342 = scalar_lea.vmem %s5, 896
      %v1343 = vld [vmem:[%s1342] sm:$0xff]
      %v1344 = vld [vmem:[%s1342 + $0x8] sm:$0xff]
      %v1345 = vld [vmem:[%s1342 + $0x10] sm:$0xff]
      %v1346 = vld [vmem:[%s1342 + $0x18] sm:$0xff]
      %v1347 = vld [vmem:[%s1342 + $0x20] sm:$0xff]
      %v1348 = vld [vmem:[%s1342 + $0x28] sm:$0xff]
      %v1349 = vld [vmem:[%s1342 + $0x30] sm:$0xff]
      %v1350 = vld [vmem:[%s1342 + $0x38] sm:$0xff]
      %v1351 = vld [vmem:[%s1342 + $0x40] sm:$0xff]
      %v1352 = vld [vmem:[%s1342 + $0x48] sm:$0xff]
      %v1353 = vld [vmem:[%s1342 + $0x50] sm:$0xff]
      %v1354 = vld [vmem:[%s1342 + $0x58] sm:$0xff]
      %v1355 = vld [vmem:[%s1342 + $0x60] sm:$0xff]
      %v1356 = vld [vmem:[%s1342 + $0x68] sm:$0xff]
      %v1357 = vld [vmem:[%s1342 + $0x70] sm:$0xff]
      %v1358 = vld [vmem:[%s1342 + $0x78] sm:$0xff]
      %v1360 = vshrl.u32 %v1324, 16
      %v1378 = vunpack.c.l.b16 %v1343
      %v1379 = vunpack.c.h.b16 %v1343
      %v1380 = vunpack.c.l.b16 %v1344
      %v1381 = vunpack.c.h.b16 %v1344
      %v1382 = vunpack.c.l.b16 %v1345
      %v1383 = vunpack.c.h.b16 %v1345
      %v1384 = vunpack.c.l.b16 %v1346
      %v1385 = vunpack.c.h.b16 %v1346
      %v1386 = vunpack.c.l.b16 %v1347
      %v1387 = vunpack.c.h.b16 %v1347
      %v1388 = vunpack.c.l.b16 %v1348
      %v1389 = vunpack.c.h.b16 %v1348
      %v1390 = vunpack.c.l.b16 %v1349
      %v1391 = vunpack.c.h.b16 %v1349
      %v1392 = vunpack.c.l.b16 %v1350
      %v1393 = vunpack.c.h.b16 %v1350
      %v1394 = vunpack.c.l.b16 %v1351
      %v1395 = vunpack.c.h.b16 %v1351
      %v1396 = vunpack.c.l.b16 %v1352
      %v1397 = vunpack.c.h.b16 %v1352
      %v1398 = vunpack.c.l.b16 %v1353
      %v1399 = vunpack.c.h.b16 %v1353
      %v1400 = vunpack.c.l.b16 %v1354
      %v1401 = vunpack.c.h.b16 %v1354
      %v1402 = vunpack.c.l.b16 %v1355
      %v1403 = vunpack.c.h.b16 %v1355
      %v1404 = vunpack.c.l.b16 %v1356
      %v1405 = vunpack.c.h.b16 %v1356
      %v1406 = vunpack.c.l.b16 %v1357
      %v1407 = vunpack.c.h.b16 %v1357
      %v1408 = vunpack.c.l.b16 %v1358
      %v1409 = vunpack.c.h.b16 %v1358
      %v1410 = vpack.c.b16 %v1382, %v1378
      %v1411 = vpack.c.b16 %v1383, %v1379
      %v1412 = vpack.c.b16 %v1384, %v1380
      %v1413 = vpack.c.b16 %v1385, %v1381
      %v1414 = vpack.c.b16 %v1390, %v1386
      %v1415 = vpack.c.b16 %v1391, %v1387
      %v1416 = vpack.c.b16 %v1392, %v1388
      %v1417 = vpack.c.b16 %v1393, %v1389
      %v1418 = vpack.c.b16 %v1398, %v1394
      %v1419 = vpack.c.b16 %v1399, %v1395
      %v1420 = vpack.c.b16 %v1400, %v1396
      %v1421 = vpack.c.b16 %v1401, %v1397
      %v1422 = vpack.c.b16 %v1406, %v1402
      %v1423 = vpack.c.b16 %v1407, %v1403
      %v1424 = vpack.c.b16 %v1408, %v1404
      %v1425 = vpack.c.b16 %v1409, %v1405
      %v1443 = vsel %vm880, %v1360, 0
      %1445 = vmatpush.bf16.msra.mxu0 0
      %1446 = vmatpush.bf16.msra.mxu0 0
      %1447 = vmatpush.bf16.msra.mxu0 0
      %1448 = vmatpush.bf16.msra.mxu0 0
      %1449 = vmatpush.bf16.msra.mxu0 %v1422
      %1450 = vmatpush.bf16.msra.mxu0 %v1418
      %1451 = vmatpush.bf16.msra.mxu0 %v1414
      %1452 = vmatpush.bf16.msra.mxu0 %v1410
      %1453 = vmatmul.bf16.gmra.mxu0 %v1443
      %v1454 = vpop.f32.mrf.mxu0
      %v1455 = vadd.f32 0.0, %v1454
      %v1456 = vpop.f32.mrf.mxu0
      %1457 = vdwg.mxu0
      %1458 = vmatpush.bf16.msra.mxu0 0
      %1459 = vmatpush.bf16.msra.mxu0 0
      %1460 = vmatpush.bf16.msra.mxu0 0
      %1461 = vmatpush.bf16.msra.mxu0 0
      %1462 = vmatpush.bf16.msra.mxu0 %v1423
      %1463 = vmatpush.bf16.msra.mxu0 %v1419
      %1464 = vmatpush.bf16.msra.mxu0 %v1415
      %1465 = vmatpush.bf16.msra.mxu0 %v1411
      %1466 = vmatmul.bf16.gmra.mxu0 %v1443
      %v1467 = vpop.f32.mrf.mxu0
      %v1468 = vadd.f32 0.0, %v1467
      %v1469 = vpop.f32.mrf.mxu0
      %1470 = vdwg.mxu0
      %1471 = vmatpush.bf16.msra.mxu0 0
      %1472 = vmatpush.bf16.msra.mxu0 0
      %1473 = vmatpush.bf16.msra.mxu0 0
      %1474 = vmatpush.bf16.msra.mxu0 0
      %1475 = vmatpush.bf16.msra.mxu0 %v1424
      %1476 = vmatpush.bf16.msra.mxu0 %v1420
      %1477 = vmatpush.bf16.msra.mxu0 %v1416
      %1478 = vmatpush.bf16.msra.mxu0 %v1412
      %1479 = vmatmul.bf16.gmra.mxu0 %v1443
      %v1480 = vpop.f32.mrf.mxu0
      %v1481 = vadd.f32 0.0, %v1480
      %v1482 = vpop.f32.mrf.mxu0
      %1483 = vdwg.mxu0
      %1484 = vmatpush.bf16.msra.mxu0 0
      %1485 = vmatpush.bf16.msra.mxu0 0
      %1486 = vmatpush.bf16.msra.mxu0 0
      %1487 = vmatpush.bf16.msra.mxu0 0
      %1488 = vmatpush.bf16.msra.mxu0 %v1425
      %1489 = vmatpush.bf16.msra.mxu0 %v1421
      %1490 = vmatpush.bf16.msra.mxu0 %v1417
      %1491 = vmatpush.bf16.msra.mxu0 %v1413
      %1492 = vmatmul.bf16.gmra.mxu0 %v1443
      %v1493 = vpop.f32.mrf.mxu0
      %v1494 = vadd.f32 0.0, %v1493
      %v1495 = vpop.f32.mrf.mxu0
      %1496 = vdwg.mxu0
      %v1498 = vrot.slane %v460, 1
      %v1499 = vsel %vm726, %v1107, %v1498
      %v1501 = vadd.f32 %v423, %v1499
      %v1503 = vrot.slane %v530, 4
      %v1505 = vadd.f32 %v492, %v1503
      %v1506 = vadd.f32 %v495, %v1503
      %v1508 = vrot.slane %v670, 1
      %v1510 = vadd.f32 %v635, %v1508
      %vm1513 = vcmask 1045504
      %v1514 = vrot.slane %v1505, 2
      %v1515 = vrot.slane %v1506, 2
      %v1516 = vsel %vm1513, %v1514, %v1515
      %v1518 = vadd.f32 %v1501, %v1516
      %v1520 = vrot.slane %v1510, 5
      %v1522 = vadd.f32 %v1121, %v1520
      %v1524 = vrot.slane %v1522, 7
      %v1526 = vadd.f32 %v1518, %v1524
      %v1528 = vrot.slane %v705, 6
      %v1530 = vadd.f32 %v1526, %v1528
      %v1531 = vadd.f32 %v1530, %v759
      %v1532 = vmax.f32 %v1531, 0.0
      %v1533 = vpack.c.bf16 %v1532, %v1532
      %s1534 = scalar_lea.vmem %s5, 1024
      %v1535 = vld [vmem:[%s1534] sm:$0xff]
      %v1536 = vld [vmem:[%s1534 + $0x8] sm:$0xff]
      %v1537 = vld [vmem:[%s1534 + $0x10] sm:$0xff]
      %v1538 = vld [vmem:[%s1534 + $0x18] sm:$0xff]
      %v1539 = vld [vmem:[%s1534 + $0x20] sm:$0xff]
      %v1540 = vld [vmem:[%s1534 + $0x28] sm:$0xff]
      %v1541 = vld [vmem:[%s1534 + $0x30] sm:$0xff]
      %v1542 = vld [vmem:[%s1534 + $0x38] sm:$0xff]
      %v1543 = vld [vmem:[%s1534 + $0x40] sm:$0xff]
      %v1544 = vld [vmem:[%s1534 + $0x48] sm:$0xff]
      %v1545 = vld [vmem:[%s1534 + $0x50] sm:$0xff]
      %v1546 = vld [vmem:[%s1534 + $0x58] sm:$0xff]
      %v1547 = vld [vmem:[%s1534 + $0x60] sm:$0xff]
      %v1548 = vld [vmem:[%s1534 + $0x68] sm:$0xff]
      %v1549 = vld [vmem:[%s1534 + $0x70] sm:$0xff]
      %v1550 = vld [vmem:[%s1534 + $0x78] sm:$0xff]
      %s1551 = scalar_lea.vmem %s5, 1152
      %v1552 = vld [vmem:[%s1551] sm:$0xff]
      %v1553 = vld [vmem:[%s1551 + $0x8] sm:$0xff]
      %v1554 = vld [vmem:[%s1551 + $0x10] sm:$0xff]
      %v1555 = vld [vmem:[%s1551 + $0x18] sm:$0xff]
      %v1556 = vld [vmem:[%s1551 + $0x20] sm:$0xff]
      %v1557 = vld [vmem:[%s1551 + $0x28] sm:$0xff]
      %v1558 = vld [vmem:[%s1551 + $0x30] sm:$0xff]
      %v1559 = vld [vmem:[%s1551 + $0x38] sm:$0xff]
      %v1560 = vld [vmem:[%s1551 + $0x40] sm:$0xff]
      %v1561 = vld [vmem:[%s1551 + $0x48] sm:$0xff]
      %v1562 = vld [vmem:[%s1551 + $0x50] sm:$0xff]
      %v1563 = vld [vmem:[%s1551 + $0x58] sm:$0xff]
      %v1564 = vld [vmem:[%s1551 + $0x60] sm:$0xff]
      %v1565 = vld [vmem:[%s1551 + $0x68] sm:$0xff]
      %v1566 = vld [vmem:[%s1551 + $0x70] sm:$0xff]
      %v1567 = vld [vmem:[%s1551 + $0x78] sm:$0xff]
      %v1569 = vshrl.u32 %v1533, 16
      %v1571 = vrot.slane %v1569, 2
      %v1588 = vunpack.c.l.b16 %v1552
      %v1589 = vunpack.c.h.b16 %v1552
      %v1590 = vunpack.c.l.b16 %v1553
      %v1591 = vunpack.c.h.b16 %v1553
      %v1592 = vunpack.c.l.b16 %v1554
      %v1593 = vunpack.c.h.b16 %v1554
      %v1594 = vunpack.c.l.b16 %v1555
      %v1595 = vunpack.c.h.b16 %v1555
      %v1596 = vunpack.c.l.b16 %v1556
      %v1597 = vunpack.c.h.b16 %v1556
      %v1598 = vunpack.c.l.b16 %v1557
      %v1599 = vunpack.c.h.b16 %v1557
      %v1600 = vunpack.c.l.b16 %v1558
      %v1601 = vunpack.c.h.b16 %v1558
      %v1602 = vunpack.c.l.b16 %v1559
      %v1603 = vunpack.c.h.b16 %v1559
      %v1604 = vunpack.c.l.b16 %v1560
      %v1605 = vunpack.c.h.b16 %v1560
      %v1606 = vunpack.c.l.b16 %v1561
      %v1607 = vunpack.c.h.b16 %v1561
      %v1608 = vunpack.c.l.b16 %v1562
      %v1609 = vunpack.c.h.b16 %v1562
      %v1610 = vunpack.c.l.b16 %v1563
      %v1611 = vunpack.c.h.b16 %v1563
      %v1612 = vunpack.c.l.b16 %v1564
      %v1613 = vunpack.c.h.b16 %v1564
      %v1614 = vunpack.c.l.b16 %v1565
      %v1615 = vunpack.c.h.b16 %v1565
      %v1616 = vunpack.c.l.b16 %v1566
      %v1617 = vunpack.c.h.b16 %v1566
      %v1618 = vunpack.c.l.b16 %v1567
      %v1619 = vunpack.c.h.b16 %v1567
      %v1620 = vpack.c.b16 %v1592, %v1588
      %v1621 = vpack.c.b16 %v1593, %v1589
      %v1622 = vpack.c.b16 %v1594, %v1590
      %v1623 = vpack.c.b16 %v1595, %v1591
      %v1624 = vpack.c.b16 %v1600, %v1596
      %v1625 = vpack.c.b16 %v1601, %v1597
      %v1626 = vpack.c.b16 %v1602, %v1598
      %v1627 = vpack.c.b16 %v1603, %v1599
      %v1628 = vpack.c.b16 %v1608, %v1604
      %v1629 = vpack.c.b16 %v1609, %v1605
      %v1630 = vpack.c.b16 %v1610, %v1606
      %v1631 = vpack.c.b16 %v1611, %v1607
      %v1632 = vpack.c.b16 %v1616, %v1612
      %v1633 = vpack.c.b16 %v1617, %v1613
      %v1634 = vpack.c.b16 %v1618, %v1614
      %v1635 = vpack.c.b16 %v1619, %v1615
      %v1653 = vsel %vm880, %v1571, 0
      %1655 = vmatpush.bf16.msra.mxu0 0
      %1656 = vmatpush.bf16.msra.mxu0 0
      %1657 = vmatpush.bf16.msra.mxu0 0
      %1658 = vmatpush.bf16.msra.mxu0 0
      %1659 = vmatpush.bf16.msra.mxu0 %v1632
      %1660 = vmatpush.bf16.msra.mxu0 %v1628
      %1661 = vmatpush.bf16.msra.mxu0 %v1624
      %1662 = vmatpush.bf16.msra.mxu0 %v1620
      %1663 = vmatmul.bf16.gmra.mxu0 %v1653
      %v1664 = vpop.f32.mrf.mxu0
      %v1665 = vadd.f32 0.0, %v1664
      %v1666 = vpop.f32.mrf.mxu0
      %1667 = vdwg.mxu0
      %1668 = vmatpush.bf16.msra.mxu0 0
      %1669 = vmatpush.bf16.msra.mxu0 0
      %1670 = vmatpush.bf16.msra.mxu0 0
      %1671 = vmatpush.bf16.msra.mxu0 0
      %1672 = vmatpush.bf16.msra.mxu0 %v1633
      %1673 = vmatpush.bf16.msra.mxu0 %v1629
      %1674 = vmatpush.bf16.msra.mxu0 %v1625
      %1675 = vmatpush.bf16.msra.mxu0 %v1621
      %1676 = vmatmul.bf16.gmra.mxu0 %v1653
      %v1677 = vpop.f32.mrf.mxu0
      %v1678 = vadd.f32 0.0, %v1677
      %v1679 = vpop.f32.mrf.mxu0
      %1680 = vdwg.mxu0
      %1681 = vmatpush.bf16.msra.mxu0 0
      %1682 = vmatpush.bf16.msra.mxu0 0
      %1683 = vmatpush.bf16.msra.mxu0 0
      %1684 = vmatpush.bf16.msra.mxu0 0
      %1685 = vmatpush.bf16.msra.mxu0 %v1634
      %1686 = vmatpush.bf16.msra.mxu0 %v1630
      %1687 = vmatpush.bf16.msra.mxu0 %v1626
      %1688 = vmatpush.bf16.msra.mxu0 %v1622
      %1689 = vmatmul.bf16.gmra.mxu0 %v1653
      %v1690 = vpop.f32.mrf.mxu0
      %v1691 = vadd.f32 0.0, %v1690
      %v1692 = vpop.f32.mrf.mxu0
      %1693 = vdwg.mxu0
      %1694 = vmatpush.bf16.msra.mxu0 0
      %1695 = vmatpush.bf16.msra.mxu0 0
      %1696 = vmatpush.bf16.msra.mxu0 0
      %1697 = vmatpush.bf16.msra.mxu0 0
      %1698 = vmatpush.bf16.msra.mxu0 %v1635
      %1699 = vmatpush.bf16.msra.mxu0 %v1631
      %1700 = vmatpush.bf16.msra.mxu0 %v1627
      %1701 = vmatpush.bf16.msra.mxu0 %v1623
      %1702 = vmatmul.bf16.gmra.mxu0 %v1653
      %v1703 = vpop.f32.mrf.mxu0
      %v1704 = vadd.f32 0.0, %v1703
      %v1705 = vpop.f32.mrf.mxu0
      %1706 = vdwg.mxu0
      %s1707 = scalar_lea.vmem %s5, 1280
      %v1708 = vld [vmem:[%s1707] sm:$0xff]
      %v1709 = vld [vmem:[%s1707 + $0x8] sm:$0xff]
      %v1710 = vld [vmem:[%s1707 + $0x10] sm:$0xff]
      %v1711 = vld [vmem:[%s1707 + $0x18] sm:$0xff]
      %v1712 = vld [vmem:[%s1707 + $0x20] sm:$0xff]
      %v1713 = vld [vmem:[%s1707 + $0x28] sm:$0xff]
      %v1714 = vld [vmem:[%s1707 + $0x30] sm:$0xff]
      %v1715 = vld [vmem:[%s1707 + $0x38] sm:$0xff]
      %v1716 = vld [vmem:[%s1707 + $0x40] sm:$0xff]
      %v1717 = vld [vmem:[%s1707 + $0x48] sm:$0xff]
      %v1718 = vld [vmem:[%s1707 + $0x50] sm:$0xff]
      %v1719 = vld [vmem:[%s1707 + $0x58] sm:$0xff]
      %v1720 = vld [vmem:[%s1707 + $0x60] sm:$0xff]
      %v1721 = vld [vmem:[%s1707 + $0x68] sm:$0xff]
      %v1722 = vld [vmem:[%s1707 + $0x70] sm:$0xff]
      %v1723 = vld [vmem:[%s1707 + $0x78] sm:$0xff]
      %s1724 = scalar_lea.vmem %s5, 1408
      %v1725 = vld [vmem:[%s1724] sm:$0xff]
      %v1726 = vld [vmem:[%s1724 + $0x8] sm:$0xff]
      %v1727 = vld [vmem:[%s1724 + $0x10] sm:$0xff]
      %v1728 = vld [vmem:[%s1724 + $0x18] sm:$0xff]
      %v1729 = vld [vmem:[%s1724 + $0x20] sm:$0xff]
      %v1730 = vld [vmem:[%s1724 + $0x28] sm:$0xff]
      %v1731 = vld [vmem:[%s1724 + $0x30] sm:$0xff]
      %v1732 = vld [vmem:[%s1724 + $0x38] sm:$0xff]
      %v1733 = vld [vmem:[%s1724 + $0x40] sm:$0xff]
      %v1734 = vld [vmem:[%s1724 + $0x48] sm:$0xff]
      %v1735 = vld [vmem:[%s1724 + $0x50] sm:$0xff]
      %v1736 = vld [vmem:[%s1724 + $0x58] sm:$0xff]
      %v1737 = vld [vmem:[%s1724 + $0x60] sm:$0xff]
      %v1738 = vld [vmem:[%s1724 + $0x68] sm:$0xff]
      %v1739 = vld [vmem:[%s1724 + $0x70] sm:$0xff]
      %v1740 = vld [vmem:[%s1724 + $0x78] sm:$0xff]
      %v1741 = vrot.slane %v1569, 3
      %v1758 = vunpack.c.l.b16 %v1725
      %v1759 = vunpack.c.h.b16 %v1725
      %v1760 = vunpack.c.l.b16 %v1726
      %v1761 = vunpack.c.h.b16 %v1726
      %v1762 = vunpack.c.l.b16 %v1727
      %v1763 = vunpack.c.h.b16 %v1727
      %v1764 = vunpack.c.l.b16 %v1728
      %v1765 = vunpack.c.h.b16 %v1728
      %v1766 = vunpack.c.l.b16 %v1729
      %v1767 = vunpack.c.h.b16 %v1729
      %v1768 = vunpack.c.l.b16 %v1730
      %v1769 = vunpack.c.h.b16 %v1730
      %v1770 = vunpack.c.l.b16 %v1731
      %v1771 = vunpack.c.h.b16 %v1731
      %v1772 = vunpack.c.l.b16 %v1732
      %v1773 = vunpack.c.h.b16 %v1732
      %v1774 = vunpack.c.l.b16 %v1733
      %v1775 = vunpack.c.h.b16 %v1733
      %v1776 = vunpack.c.l.b16 %v1734
      %v1777 = vunpack.c.h.b16 %v1734
      %v1778 = vunpack.c.l.b16 %v1735
      %v1779 = vunpack.c.h.b16 %v1735
      %v1780 = vunpack.c.l.b16 %v1736
      %v1781 = vunpack.c.h.b16 %v1736
      %v1782 = vunpack.c.l.b16 %v1737
      %v1783 = vunpack.c.h.b16 %v1737
      %v1784 = vunpack.c.l.b16 %v1738
      %v1785 = vunpack.c.h.b16 %v1738
      %v1786 = vunpack.c.l.b16 %v1739
      %v1787 = vunpack.c.h.b16 %v1739
      %v1788 = vunpack.c.l.b16 %v1740
      %v1789 = vunpack.c.h.b16 %v1740
      %v1790 = vpack.c.b16 %v1762, %v1758
      %v1791 = vpack.c.b16 %v1763, %v1759
      %v1792 = vpack.c.b16 %v1764, %v1760
      %v1793 = vpack.c.b16 %v1765, %v1761
      %v1794 = vpack.c.b16 %v1770, %v1766
      %v1795 = vpack.c.b16 %v1771, %v1767
      %v1796 = vpack.c.b16 %v1772, %v1768
      %v1797 = vpack.c.b16 %v1773, %v1769
      %v1798 = vpack.c.b16 %v1778, %v1774
      %v1799 = vpack.c.b16 %v1779, %v1775
      %v1800 = vpack.c.b16 %v1780, %v1776
      %v1801 = vpack.c.b16 %v1781, %v1777
      %v1802 = vpack.c.b16 %v1786, %v1782
      %v1803 = vpack.c.b16 %v1787, %v1783
      %v1804 = vpack.c.b16 %v1788, %v1784
      %v1805 = vpack.c.b16 %v1789, %v1785
      %v1823 = vsel %vm880, %v1741, 0
      %1825 = vmatpush.bf16.msra.mxu0 0
      %1826 = vmatpush.bf16.msra.mxu0 0
      %1827 = vmatpush.bf16.msra.mxu0 0
      %1828 = vmatpush.bf16.msra.mxu0 0
      %1829 = vmatpush.bf16.msra.mxu0 %v1802
      %1830 = vmatpush.bf16.msra.mxu0 %v1798
      %1831 = vmatpush.bf16.msra.mxu0 %v1794
      %1832 = vmatpush.bf16.msra.mxu0 %v1790
      %1833 = vmatmul.bf16.gmra.mxu0 %v1823
      %v1834 = vpop.f32.mrf.mxu0
      %v1835 = vadd.f32 0.0, %v1834
      %v1836 = vpop.f32.mrf.mxu0
      %1837 = vdwg.mxu0
      %1838 = vmatpush.bf16.msra.mxu0 0
      %1839 = vmatpush.bf16.msra.mxu0 0
      %1840 = vmatpush.bf16.msra.mxu0 0
      %1841 = vmatpush.bf16.msra.mxu0 0
      %1842 = vmatpush.bf16.msra.mxu0 %v1803
      %1843 = vmatpush.bf16.msra.mxu0 %v1799
      %1844 = vmatpush.bf16.msra.mxu0 %v1795
      %1845 = vmatpush.bf16.msra.mxu0 %v1791
      %1846 = vmatmul.bf16.gmra.mxu0 %v1823
      %v1847 = vpop.f32.mrf.mxu0
      %v1848 = vadd.f32 0.0, %v1847
      %v1849 = vpop.f32.mrf.mxu0
      %1850 = vdwg.mxu0
      %1851 = vmatpush.bf16.msra.mxu0 0
      %1852 = vmatpush.bf16.msra.mxu0 0
      %1853 = vmatpush.bf16.msra.mxu0 0
      %1854 = vmatpush.bf16.msra.mxu0 0
      %1855 = vmatpush.bf16.msra.mxu0 %v1804
      %1856 = vmatpush.bf16.msra.mxu0 %v1800
      %1857 = vmatpush.bf16.msra.mxu0 %v1796
      %1858 = vmatpush.bf16.msra.mxu0 %v1792
      %1859 = vmatmul.bf16.gmra.mxu0 %v1823
      %v1860 = vpop.f32.mrf.mxu0
      %v1861 = vadd.f32 0.0, %v1860
      %v1862 = vpop.f32.mrf.mxu0
      %1863 = vdwg.mxu0
      %1864 = vmatpush.bf16.msra.mxu0 0
      %1865 = vmatpush.bf16.msra.mxu0 0
      %1866 = vmatpush.bf16.msra.mxu0 0
      %1867 = vmatpush.bf16.msra.mxu0 0
      %1868 = vmatpush.bf16.msra.mxu0 %v1805
      %1869 = vmatpush.bf16.msra.mxu0 %v1801
      %1870 = vmatpush.bf16.msra.mxu0 %v1797
      %1871 = vmatpush.bf16.msra.mxu0 %v1793
      %1872 = vmatmul.bf16.gmra.mxu0 %v1823
      %v1873 = vpop.f32.mrf.mxu0
      %v1874 = vadd.f32 0.0, %v1873
      %v1875 = vpop.f32.mrf.mxu0
      %1876 = vdwg.mxu0
      %v1877 = vld [vmem:[%s6] sm:$0xf]
      %v1894 = vunpack.c.l.b16 %v764
      %v1895 = vunpack.c.h.b16 %v764
      %v1896 = vunpack.c.l.b16 %v765
      %v1897 = vunpack.c.h.b16 %v765
      %v1898 = vunpack.c.l.b16 %v766
      %v1899 = vunpack.c.h.b16 %v766
      %v1900 = vunpack.c.l.b16 %v767
      %v1901 = vunpack.c.h.b16 %v767
      %v1902 = vunpack.c.l.b16 %v768
      %v1903 = vunpack.c.h.b16 %v768
      %v1904 = vunpack.c.l.b16 %v769
      %v1905 = vunpack.c.h.b16 %v769
      %v1906 = vunpack.c.l.b16 %v770
      %v1907 = vunpack.c.h.b16 %v770
      %v1908 = vunpack.c.l.b16 %v771
      %v1909 = vunpack.c.h.b16 %v771
      %v1910 = vunpack.c.l.b16 %v772
      %v1911 = vunpack.c.h.b16 %v772
      %v1912 = vunpack.c.l.b16 %v773
      %v1913 = vunpack.c.h.b16 %v773
      %v1914 = vunpack.c.l.b16 %v774
      %v1915 = vunpack.c.h.b16 %v774
      %v1916 = vunpack.c.l.b16 %v775
      %v1917 = vunpack.c.h.b16 %v775
      %v1918 = vunpack.c.l.b16 %v776
      %v1919 = vunpack.c.h.b16 %v776
      %v1920 = vunpack.c.l.b16 %v777
      %v1921 = vunpack.c.h.b16 %v777
      %v1922 = vunpack.c.l.b16 %v778
      %v1923 = vunpack.c.h.b16 %v778
      %v1924 = vunpack.c.l.b16 %v779
      %v1925 = vunpack.c.h.b16 %v779
      %v1926 = vpack.c.b16 %v1898, %v1894
      %v1927 = vpack.c.b16 %v1899, %v1895
      %v1928 = vpack.c.b16 %v1900, %v1896
      %v1929 = vpack.c.b16 %v1901, %v1897
      %v1930 = vpack.c.b16 %v1906, %v1902
      %v1931 = vpack.c.b16 %v1907, %v1903
      %v1932 = vpack.c.b16 %v1908, %v1904
      %v1933 = vpack.c.b16 %v1909, %v1905
      %v1934 = vpack.c.b16 %v1914, %v1910
      %v1935 = vpack.c.b16 %v1915, %v1911
      %v1936 = vpack.c.b16 %v1916, %v1912
      %v1937 = vpack.c.b16 %v1917, %v1913
      %v1938 = vpack.c.b16 %v1922, %v1918
      %v1939 = vpack.c.b16 %v1923, %v1919
      %v1940 = vpack.c.b16 %v1924, %v1920
      %v1941 = vpack.c.b16 %v1925, %v1921
      %v1958 = vsel %vm880, %v763, 0
      %1960 = vmatpush.bf16.msra.mxu0 0
      %1961 = vmatpush.bf16.msra.mxu0 0
      %1962 = vmatpush.bf16.msra.mxu0 0
      %1963 = vmatpush.bf16.msra.mxu0 0
      %1964 = vmatpush.bf16.msra.mxu0 %v1938
      %1965 = vmatpush.bf16.msra.mxu0 %v1934
      %1966 = vmatpush.bf16.msra.mxu0 %v1930
      %1967 = vmatpush.bf16.msra.mxu0 %v1926
      %1968 = vmatmul.bf16.gmra.mxu0 %v1958
      %v1969 = vpop.f32.mrf.mxu0
      %v1970 = vadd.f32 %v894, %v1969
      %v1971 = vpop.f32.mrf.mxu0
      %1972 = vdwg.mxu0
      %1973 = vmatpush.bf16.msra.mxu0 0
      %1974 = vmatpush.bf16.msra.mxu0 0
      %1975 = vmatpush.bf16.msra.mxu0 0
      %1976 = vmatpush.bf16.msra.mxu0 0
      %1977 = vmatpush.bf16.msra.mxu0 %v1939
      %1978 = vmatpush.bf16.msra.mxu0 %v1935
      %1979 = vmatpush.bf16.msra.mxu0 %v1931
      %1980 = vmatpush.bf16.msra.mxu0 %v1927
      %1981 = vmatmul.bf16.gmra.mxu0 %v1958
      %v1982 = vpop.f32.mrf.mxu0
      %v1983 = vadd.f32 %v907, %v1982
      %v1984 = vpop.f32.mrf.mxu0
      %1985 = vdwg.mxu0
      %1986 = vmatpush.bf16.msra.mxu0 0
      %1987 = vmatpush.bf16.msra.mxu0 0
      %1988 = vmatpush.bf16.msra.mxu0 0
      %1989 = vmatpush.bf16.msra.mxu0 0
      %1990 = vmatpush.bf16.msra.mxu0 %v1940
      %1991 = vmatpush.bf16.msra.mxu0 %v1936
      %1992 = vmatpush.bf16.msra.mxu0 %v1932
      %1993 = vmatpush.bf16.msra.mxu0 %v1928
      %1994 = vmatmul.bf16.gmra.mxu0 %v1958
      %v1995 = vpop.f32.mrf.mxu0
      %v1996 = vadd.f32 %v920, %v1995
      %v1997 = vpop.f32.mrf.mxu0
      %1998 = vdwg.mxu0
      %1999 = vmatpush.bf16.msra.mxu0 0
      %2000 = vmatpush.bf16.msra.mxu0 0
      %2001 = vmatpush.bf16.msra.mxu0 0
      %2002 = vmatpush.bf16.msra.mxu0 0
      %2003 = vmatpush.bf16.msra.mxu0 %v1941
      %2004 = vmatpush.bf16.msra.mxu0 %v1937
      %2005 = vmatpush.bf16.msra.mxu0 %v1933
      %2006 = vmatpush.bf16.msra.mxu0 %v1929
      %2007 = vmatmul.bf16.gmra.mxu0 %v1958
      %v2008 = vpop.f32.mrf.mxu0
      %v2009 = vadd.f32 %v933, %v2008
      %v2010 = vpop.f32.mrf.mxu0
      %2011 = vdwg.mxu0
      %v2013 = vrot.slane %v763, 1
      %v2030 = vunpack.c.l.b16 %v937
      %v2031 = vunpack.c.h.b16 %v937
      %v2032 = vunpack.c.l.b16 %v938
      %v2033 = vunpack.c.h.b16 %v938
      %v2034 = vunpack.c.l.b16 %v939
      %v2035 = vunpack.c.h.b16 %v939
      %v2036 = vunpack.c.l.b16 %v940
      %v2037 = vunpack.c.h.b16 %v940
      %v2038 = vunpack.c.l.b16 %v941
      %v2039 = vunpack.c.h.b16 %v941
      %v2040 = vunpack.c.l.b16 %v942
      %v2041 = vunpack.c.h.b16 %v942
      %v2042 = vunpack.c.l.b16 %v943
      %v2043 = vunpack.c.h.b16 %v943
      %v2044 = vunpack.c.l.b16 %v944
      %v2045 = vunpack.c.h.b16 %v944
      %v2046 = vunpack.c.l.b16 %v945
      %v2047 = vunpack.c.h.b16 %v945
      %v2048 = vunpack.c.l.b16 %v946
      %v2049 = vunpack.c.h.b16 %v946
      %v2050 = vunpack.c.l.b16 %v947
      %v2051 = vunpack.c.h.b16 %v947
      %v2052 = vunpack.c.l.b16 %v948
      %v2053 = vunpack.c.h.b16 %v948
      %v2054 = vunpack.c.l.b16 %v949
      %v2055 = vunpack.c.h.b16 %v949
      %v2056 = vunpack.c.l.b16 %v950
      %v2057 = vunpack.c.h.b16 %v950
      %v2058 = vunpack.c.l.b16 %v951
      %v2059 = vunpack.c.h.b16 %v951
      %v2060 = vunpack.c.l.b16 %v952
      %v2061 = vunpack.c.h.b16 %v952
      %v2062 = vpack.c.b16 %v2034, %v2030
      %v2063 = vpack.c.b16 %v2035, %v2031
      %v2064 = vpack.c.b16 %v2036, %v2032
      %v2065 = vpack.c.b16 %v2037, %v2033
      %v2066 = vpack.c.b16 %v2042, %v2038
      %v2067 = vpack.c.b16 %v2043, %v2039
      %v2068 = vpack.c.b16 %v2044, %v2040
      %v2069 = vpack.c.b16 %v2045, %v2041
      %v2070 = vpack.c.b16 %v2050, %v2046
      %v2071 = vpack.c.b16 %v2051, %v2047
      %v2072 = vpack.c.b16 %v2052, %v2048
      %v2073 = vpack.c.b16 %v2053, %v2049
      %v2074 = vpack.c.b16 %v2058, %v2054
      %v2075 = vpack.c.b16 %v2059, %v2055
      %v2076 = vpack.c.b16 %v2060, %v2056
      %v2077 = vpack.c.b16 %v2061, %v2057
      %v2095 = vsel %vm880, %v2013, 0
      %2097 = vmatpush.bf16.msra.mxu0 0
      %2098 = vmatpush.bf16.msra.mxu0 0
      %2099 = vmatpush.bf16.msra.mxu0 0
      %2100 = vmatpush.bf16.msra.mxu0 0
      %2101 = vmatpush.bf16.msra.mxu0 %v2074
      %2102 = vmatpush.bf16.msra.mxu0 %v2070
      %2103 = vmatpush.bf16.msra.mxu0 %v2066
      %2104 = vmatpush.bf16.msra.mxu0 %v2062
      %2105 = vmatmul.bf16.gmra.mxu0 %v2095
      %v2106 = vpop.f32.mrf.mxu0
      %v2107 = vadd.f32 %v1064, %v2106
      %v2108 = vpop.f32.mrf.mxu0
      %2109 = vdwg.mxu0
      %2110 = vmatpush.bf16.msra.mxu0 0
      %2111 = vmatpush.bf16.msra.mxu0 0
      %2112 = vmatpush.bf16.msra.mxu0 0
      %2113 = vmatpush.bf16.msra.mxu0 0
      %2114 = vmatpush.bf16.msra.mxu0 %v2075
      %2115 = vmatpush.bf16.msra.mxu0 %v2071
      %2116 = vmatpush.bf16.msra.mxu0 %v2067
      %2117 = vmatpush.bf16.msra.mxu0 %v2063
      %2118 = vmatmul.bf16.gmra.mxu0 %v2095
      %v2119 = vpop.f32.mrf.mxu0
      %v2120 = vadd.f32 %v1077, %v2119
      %v2121 = vpop.f32.mrf.mxu0
      %2122 = vdwg.mxu0
      %2123 = vmatpush.bf16.msra.mxu0 0
      %2124 = vmatpush.bf16.msra.mxu0 0
      %2125 = vmatpush.bf16.msra.mxu0 0
      %2126 = vmatpush.bf16.msra.mxu0 0
      %2127 = vmatpush.bf16.msra.mxu0 %v2076
      %2128 = vmatpush.bf16.msra.mxu0 %v2072
      %2129 = vmatpush.bf16.msra.mxu0 %v2068
      %2130 = vmatpush.bf16.msra.mxu0 %v2064
      %2131 = vmatmul.bf16.gmra.mxu0 %v2095
      %v2132 = vpop.f32.mrf.mxu0
      %v2133 = vadd.f32 %v1090, %v2132
      %v2134 = vpop.f32.mrf.mxu0
      %2135 = vdwg.mxu0
      %2136 = vmatpush.bf16.msra.mxu0 0
      %2137 = vmatpush.bf16.msra.mxu0 0
      %2138 = vmatpush.bf16.msra.mxu0 0
      %2139 = vmatpush.bf16.msra.mxu0 0
      %2140 = vmatpush.bf16.msra.mxu0 %v2077
      %2141 = vmatpush.bf16.msra.mxu0 %v2073
      %2142 = vmatpush.bf16.msra.mxu0 %v2069
      %2143 = vmatpush.bf16.msra.mxu0 %v2065
      %2144 = vmatmul.bf16.gmra.mxu0 %v2095
      %v2145 = vpop.f32.mrf.mxu0
      %v2146 = vadd.f32 %v1103, %v2145
      %v2147 = vpop.f32.mrf.mxu0
      %2148 = vdwg.mxu0
      %v2150 = vrot.slane %v1150, 3
      %v2167 = vunpack.c.l.b16 %v1152
      %v2168 = vunpack.c.h.b16 %v1152
      %v2169 = vunpack.c.l.b16 %v1153
      %v2170 = vunpack.c.h.b16 %v1153
      %v2171 = vunpack.c.l.b16 %v1154
      %v2172 = vunpack.c.h.b16 %v1154
      %v2173 = vunpack.c.l.b16 %v1155
      %v2174 = vunpack.c.h.b16 %v1155
      %v2175 = vunpack.c.l.b16 %v1156
      %v2176 = vunpack.c.h.b16 %v1156
      %v2177 = vunpack.c.l.b16 %v1157
      %v2178 = vunpack.c.h.b16 %v1157
      %v2179 = vunpack.c.l.b16 %v1158
      %v2180 = vunpack.c.h.b16 %v1158
      %v2181 = vunpack.c.l.b16 %v1159
      %v2182 = vunpack.c.h.b16 %v1159
      %v2183 = vunpack.c.l.b16 %v1160
      %v2184 = vunpack.c.h.b16 %v1160
      %v2185 = vunpack.c.l.b16 %v1161
      %v2186 = vunpack.c.h.b16 %v1161
      %v2187 = vunpack.c.l.b16 %v1162
      %v2188 = vunpack.c.h.b16 %v1162
      %v2189 = vunpack.c.l.b16 %v1163
      %v2190 = vunpack.c.h.b16 %v1163
      %v2191 = vunpack.c.l.b16 %v1164
      %v2192 = vunpack.c.h.b16 %v1164
      %v2193 = vunpack.c.l.b16 %v1165
      %v2194 = vunpack.c.h.b16 %v1165
      %v2195 = vunpack.c.l.b16 %v1166
      %v2196 = vunpack.c.h.b16 %v1166
      %v2197 = vunpack.c.l.b16 %v1167
      %v2198 = vunpack.c.h.b16 %v1167
      %v2199 = vpack.c.b16 %v2171, %v2167
      %v2200 = vpack.c.b16 %v2172, %v2168
      %v2201 = vpack.c.b16 %v2173, %v2169
      %v2202 = vpack.c.b16 %v2174, %v2170
      %v2203 = vpack.c.b16 %v2179, %v2175
      %v2204 = vpack.c.b16 %v2180, %v2176
      %v2205 = vpack.c.b16 %v2181, %v2177
      %v2206 = vpack.c.b16 %v2182, %v2178
      %v2207 = vpack.c.b16 %v2187, %v2183
      %v2208 = vpack.c.b16 %v2188, %v2184
      %v2209 = vpack.c.b16 %v2189, %v2185
      %v2210 = vpack.c.b16 %v2190, %v2186
      %v2211 = vpack.c.b16 %v2195, %v2191
      %v2212 = vpack.c.b16 %v2196, %v2192
      %v2213 = vpack.c.b16 %v2197, %v2193
      %v2214 = vpack.c.b16 %v2198, %v2194
      %v2232 = vsel %vm880, %v2150, 0
      %2234 = vmatpush.bf16.msra.mxu0 0
      %2235 = vmatpush.bf16.msra.mxu0 0
      %2236 = vmatpush.bf16.msra.mxu0 0
      %2237 = vmatpush.bf16.msra.mxu0 0
      %2238 = vmatpush.bf16.msra.mxu0 %v2211
      %2239 = vmatpush.bf16.msra.mxu0 %v2207
      %2240 = vmatpush.bf16.msra.mxu0 %v2203
      %2241 = vmatpush.bf16.msra.mxu0 %v2199
      %2242 = vmatmul.bf16.gmra.mxu0 %v2232
      %v2243 = vpop.f32.mrf.mxu0
      %v2244 = vadd.f32 %v1282, %v2243
      %v2245 = vpop.f32.mrf.mxu0
      %2246 = vdwg.mxu0
      %2247 = vmatpush.bf16.msra.mxu0 0
      %2248 = vmatpush.bf16.msra.mxu0 0
      %2249 = vmatpush.bf16.msra.mxu0 0
      %2250 = vmatpush.bf16.msra.mxu0 0
      %2251 = vmatpush.bf16.msra.mxu0 %v2212
      %2252 = vmatpush.bf16.msra.mxu0 %v2208
      %2253 = vmatpush.bf16.msra.mxu0 %v2204
      %2254 = vmatpush.bf16.msra.mxu0 %v2200
      %2255 = vmatmul.bf16.gmra.mxu0 %v2232
      %v2256 = vpop.f32.mrf.mxu0
      %v2257 = vadd.f32 %v1295, %v2256
      %v2258 = vpop.f32.mrf.mxu0
      %2259 = vdwg.mxu0
      %2260 = vmatpush.bf16.msra.mxu0 0
      %2261 = vmatpush.bf16.msra.mxu0 0
      %2262 = vmatpush.bf16.msra.mxu0 0
      %2263 = vmatpush.bf16.msra.mxu0 0
      %2264 = vmatpush.bf16.msra.mxu0 %v2213
      %2265 = vmatpush.bf16.msra.mxu0 %v2209
      %2266 = vmatpush.bf16.msra.mxu0 %v2205
      %2267 = vmatpush.bf16.msra.mxu0 %v2201
      %2268 = vmatmul.bf16.gmra.mxu0 %v2232
      %v2269 = vpop.f32.mrf.mxu0
      %v2270 = vadd.f32 %v1308, %v2269
      %v2271 = vpop.f32.mrf.mxu0
      %2272 = vdwg.mxu0
      %2273 = vmatpush.bf16.msra.mxu0 0
      %2274 = vmatpush.bf16.msra.mxu0 0
      %2275 = vmatpush.bf16.msra.mxu0 0
      %2276 = vmatpush.bf16.msra.mxu0 0
      %2277 = vmatpush.bf16.msra.mxu0 %v2214
      %2278 = vmatpush.bf16.msra.mxu0 %v2210
      %2279 = vmatpush.bf16.msra.mxu0 %v2206
      %2280 = vmatpush.bf16.msra.mxu0 %v2202
      %2281 = vmatmul.bf16.gmra.mxu0 %v2232
      %v2282 = vpop.f32.mrf.mxu0
      %v2283 = vadd.f32 %v1321, %v2282
      %v2284 = vpop.f32.mrf.mxu0
      %2285 = vdwg.mxu0
      %v2302 = vunpack.c.l.b16 %v1326
      %v2303 = vunpack.c.h.b16 %v1326
      %v2304 = vunpack.c.l.b16 %v1327
      %v2305 = vunpack.c.h.b16 %v1327
      %v2306 = vunpack.c.l.b16 %v1328
      %v2307 = vunpack.c.h.b16 %v1328
      %v2308 = vunpack.c.l.b16 %v1329
      %v2309 = vunpack.c.h.b16 %v1329
      %v2310 = vunpack.c.l.b16 %v1330
      %v2311 = vunpack.c.h.b16 %v1330
      %v2312 = vunpack.c.l.b16 %v1331
      %v2313 = vunpack.c.h.b16 %v1331
      %v2314 = vunpack.c.l.b16 %v1332
      %v2315 = vunpack.c.h.b16 %v1332
      %v2316 = vunpack.c.l.b16 %v1333
      %v2317 = vunpack.c.h.b16 %v1333
      %v2318 = vunpack.c.l.b16 %v1334
      %v2319 = vunpack.c.h.b16 %v1334
      %v2320 = vunpack.c.l.b16 %v1335
      %v2321 = vunpack.c.h.b16 %v1335
      %v2322 = vunpack.c.l.b16 %v1336
      %v2323 = vunpack.c.h.b16 %v1336
      %v2324 = vunpack.c.l.b16 %v1337
      %v2325 = vunpack.c.h.b16 %v1337
      %v2326 = vunpack.c.l.b16 %v1338
      %v2327 = vunpack.c.h.b16 %v1338
      %v2328 = vunpack.c.l.b16 %v1339
      %v2329 = vunpack.c.h.b16 %v1339
      %v2330 = vunpack.c.l.b16 %v1340
      %v2331 = vunpack.c.h.b16 %v1340
      %v2332 = vunpack.c.l.b16 %v1341
      %v2333 = vunpack.c.h.b16 %v1341
      %v2334 = vpack.c.b16 %v2306, %v2302
      %v2335 = vpack.c.b16 %v2307, %v2303
      %v2336 = vpack.c.b16 %v2308, %v2304
      %v2337 = vpack.c.b16 %v2309, %v2305
      %v2338 = vpack.c.b16 %v2314, %v2310
      %v2339 = vpack.c.b16 %v2315, %v2311
      %v2340 = vpack.c.b16 %v2316, %v2312
      %v2341 = vpack.c.b16 %v2317, %v2313
      %v2342 = vpack.c.b16 %v2322, %v2318
      %v2343 = vpack.c.b16 %v2323, %v2319
      %v2344 = vpack.c.b16 %v2324, %v2320
      %v2345 = vpack.c.b16 %v2325, %v2321
      %v2346 = vpack.c.b16 %v2330, %v2326
      %v2347 = vpack.c.b16 %v2331, %v2327
      %v2348 = vpack.c.b16 %v2332, %v2328
      %v2349 = vpack.c.b16 %v2333, %v2329
      %v2366 = vsel %vm880, %v1324, 0
      %2368 = vmatpush.bf16.msra.mxu0 0
      %2369 = vmatpush.bf16.msra.mxu0 0
      %2370 = vmatpush.bf16.msra.mxu0 0
      %2371 = vmatpush.bf16.msra.mxu0 0
      %2372 = vmatpush.bf16.msra.mxu0 %v2346
      %2373 = vmatpush.bf16.msra.mxu0 %v2342
      %2374 = vmatpush.bf16.msra.mxu0 %v2338
      %2375 = vmatpush.bf16.msra.mxu0 %v2334
      %2376 = vmatmul.bf16.gmra.mxu0 %v2366
      %v2377 = vpop.f32.mrf.mxu0
      %v2378 = vadd.f32 %v1455, %v2377
      %v2379 = vpop.f32.mrf.mxu0
      %2380 = vdwg.mxu0
      %2381 = vmatpush.bf16.msra.mxu0 0
      %2382 = vmatpush.bf16.msra.mxu0 0
      %2383 = vmatpush.bf16.msra.mxu0 0
      %2384 = vmatpush.bf16.msra.mxu0 0
      %2385 = vmatpush.bf16.msra.mxu0 %v2347
      %2386 = vmatpush.bf16.msra.mxu0 %v2343
      %2387 = vmatpush.bf16.msra.mxu0 %v2339
      %2388 = vmatpush.bf16.msra.mxu0 %v2335
      %2389 = vmatmul.bf16.gmra.mxu0 %v2366
      %v2390 = vpop.f32.mrf.mxu0
      %v2391 = vadd.f32 %v1468, %v2390
      %v2392 = vpop.f32.mrf.mxu0
      %2393 = vdwg.mxu0
      %2394 = vmatpush.bf16.msra.mxu0 0
      %2395 = vmatpush.bf16.msra.mxu0 0
      %2396 = vmatpush.bf16.msra.mxu0 0
      %2397 = vmatpush.bf16.msra.mxu0 0
      %2398 = vmatpush.bf16.msra.mxu0 %v2348
      %2399 = vmatpush.bf16.msra.mxu0 %v2344
      %2400 = vmatpush.bf16.msra.mxu0 %v2340
      %2401 = vmatpush.bf16.msra.mxu0 %v2336
      %2402 = vmatmul.bf16.gmra.mxu0 %v2366
      %v2403 = vpop.f32.mrf.mxu0
      %v2404 = vadd.f32 %v1481, %v2403
      %v2405 = vpop.f32.mrf.mxu0
      %2406 = vdwg.mxu0
      %2407 = vmatpush.bf16.msra.mxu0 0
      %2408 = vmatpush.bf16.msra.mxu0 0
      %2409 = vmatpush.bf16.msra.mxu0 0
      %2410 = vmatpush.bf16.msra.mxu0 0
      %2411 = vmatpush.bf16.msra.mxu0 %v2349
      %2412 = vmatpush.bf16.msra.mxu0 %v2345
      %2413 = vmatpush.bf16.msra.mxu0 %v2341
      %2414 = vmatpush.bf16.msra.mxu0 %v2337
      %2415 = vmatmul.bf16.gmra.mxu0 %v2366
      %v2416 = vpop.f32.mrf.mxu0
      %v2417 = vadd.f32 %v1494, %v2416
      %v2418 = vpop.f32.mrf.mxu0
      %2419 = vdwg.mxu0
      %v2421 = vrot.slane %v1533, 2
      %v2438 = vunpack.c.l.b16 %v1535
      %v2439 = vunpack.c.h.b16 %v1535
      %v2440 = vunpack.c.l.b16 %v1536
      %v2441 = vunpack.c.h.b16 %v1536
      %v2442 = vunpack.c.l.b16 %v1537
      %v2443 = vunpack.c.h.b16 %v1537
      %v2444 = vunpack.c.l.b16 %v1538
      %v2445 = vunpack.c.h.b16 %v1538
      %v2446 = vunpack.c.l.b16 %v1539
      %v2447 = vunpack.c.h.b16 %v1539
      %v2448 = vunpack.c.l.b16 %v1540
      %v2449 = vunpack.c.h.b16 %v1540
      %v2450 = vunpack.c.l.b16 %v1541
      %v2451 = vunpack.c.h.b16 %v1541
      %v2452 = vunpack.c.l.b16 %v1542
      %v2453 = vunpack.c.h.b16 %v1542
      %v2454 = vunpack.c.l.b16 %v1543
      %v2455 = vunpack.c.h.b16 %v1543
      %v2456 = vunpack.c.l.b16 %v1544
      %v2457 = vunpack.c.h.b16 %v1544
      %v2458 = vunpack.c.l.b16 %v1545
      %v2459 = vunpack.c.h.b16 %v1545
      %v2460 = vunpack.c.l.b16 %v1546
      %v2461 = vunpack.c.h.b16 %v1546
      %v2462 = vunpack.c.l.b16 %v1547
      %v2463 = vunpack.c.h.b16 %v1547
      %v2464 = vunpack.c.l.b16 %v1548
      %v2465 = vunpack.c.h.b16 %v1548
      %v2466 = vunpack.c.l.b16 %v1549
      %v2467 = vunpack.c.h.b16 %v1549
      %v2468 = vunpack.c.l.b16 %v1550
      %v2469 = vunpack.c.h.b16 %v1550
      %v2470 = vpack.c.b16 %v2442, %v2438
      %v2471 = vpack.c.b16 %v2443, %v2439
      %v2472 = vpack.c.b16 %v2444, %v2440
      %v2473 = vpack.c.b16 %v2445, %v2441
      %v2474 = vpack.c.b16 %v2450, %v2446
      %v2475 = vpack.c.b16 %v2451, %v2447
      %v2476 = vpack.c.b16 %v2452, %v2448
      %v2477 = vpack.c.b16 %v2453, %v2449
      %v2478 = vpack.c.b16 %v2458, %v2454
      %v2479 = vpack.c.b16 %v2459, %v2455
      %v2480 = vpack.c.b16 %v2460, %v2456
      %v2481 = vpack.c.b16 %v2461, %v2457
      %v2482 = vpack.c.b16 %v2466, %v2462
      %v2483 = vpack.c.b16 %v2467, %v2463
      %v2484 = vpack.c.b16 %v2468, %v2464
      %v2485 = vpack.c.b16 %v2469, %v2465
      %v2503 = vsel %vm880, %v2421, 0
      %2505 = vmatpush.bf16.msra.mxu0 0
      %2506 = vmatpush.bf16.msra.mxu0 0
      %2507 = vmatpush.bf16.msra.mxu0 0
      %2508 = vmatpush.bf16.msra.mxu0 0
      %2509 = vmatpush.bf16.msra.mxu0 %v2482
      %2510 = vmatpush.bf16.msra.mxu0 %v2478
      %2511 = vmatpush.bf16.msra.mxu0 %v2474
      %2512 = vmatpush.bf16.msra.mxu0 %v2470
      %2513 = vmatmul.bf16.gmra.mxu0 %v2503
      %v2514 = vpop.f32.mrf.mxu0
      %v2515 = vadd.f32 %v1665, %v2514
      %v2516 = vpop.f32.mrf.mxu0
      %2517 = vdwg.mxu0
      %2518 = vmatpush.bf16.msra.mxu0 0
      %2519 = vmatpush.bf16.msra.mxu0 0
      %2520 = vmatpush.bf16.msra.mxu0 0
      %2521 = vmatpush.bf16.msra.mxu0 0
      %2522 = vmatpush.bf16.msra.mxu0 %v2483
      %2523 = vmatpush.bf16.msra.mxu0 %v2479
      %2524 = vmatpush.bf16.msra.mxu0 %v2475
      %2525 = vmatpush.bf16.msra.mxu0 %v2471
      %2526 = vmatmul.bf16.gmra.mxu0 %v2503
      %v2527 = vpop.f32.mrf.mxu0
      %v2528 = vadd.f32 %v1678, %v2527
      %v2529 = vpop.f32.mrf.mxu0
      %2530 = vdwg.mxu0
      %2531 = vmatpush.bf16.msra.mxu0 0
      %2532 = vmatpush.bf16.msra.mxu0 0
      %2533 = vmatpush.bf16.msra.mxu0 0
      %2534 = vmatpush.bf16.msra.mxu0 0
      %2535 = vmatpush.bf16.msra.mxu0 %v2484
      %2536 = vmatpush.bf16.msra.mxu0 %v2480
      %2537 = vmatpush.bf16.msra.mxu0 %v2476
      %2538 = vmatpush.bf16.msra.mxu0 %v2472
      %2539 = vmatmul.bf16.gmra.mxu0 %v2503
      %v2540 = vpop.f32.mrf.mxu0
      %v2541 = vadd.f32 %v1691, %v2540
      %v2542 = vpop.f32.mrf.mxu0
      %2543 = vdwg.mxu0
      %2544 = vmatpush.bf16.msra.mxu0 0
      %2545 = vmatpush.bf16.msra.mxu0 0
      %2546 = vmatpush.bf16.msra.mxu0 0
      %2547 = vmatpush.bf16.msra.mxu0 0
      %2548 = vmatpush.bf16.msra.mxu0 %v2485
      %2549 = vmatpush.bf16.msra.mxu0 %v2481
      %2550 = vmatpush.bf16.msra.mxu0 %v2477
      %2551 = vmatpush.bf16.msra.mxu0 %v2473
      %2552 = vmatmul.bf16.gmra.mxu0 %v2503
      %v2553 = vpop.f32.mrf.mxu0
      %v2554 = vadd.f32 %v1704, %v2553
      %v2555 = vpop.f32.mrf.mxu0
      %2556 = vdwg.mxu0
      %v2557 = vrot.slane %v1533, 3
      %v2574 = vunpack.c.l.b16 %v1708
      %v2575 = vunpack.c.h.b16 %v1708
      %v2576 = vunpack.c.l.b16 %v1709
      %v2577 = vunpack.c.h.b16 %v1709
      %v2578 = vunpack.c.l.b16 %v1710
      %v2579 = vunpack.c.h.b16 %v1710
      %v2580 = vunpack.c.l.b16 %v1711
      %v2581 = vunpack.c.h.b16 %v1711
      %v2582 = vunpack.c.l.b16 %v1712
      %v2583 = vunpack.c.h.b16 %v1712
      %v2584 = vunpack.c.l.b16 %v1713
      %v2585 = vunpack.c.h.b16 %v1713
      %v2586 = vunpack.c.l.b16 %v1714
      %v2587 = vunpack.c.h.b16 %v1714
      %v2588 = vunpack.c.l.b16 %v1715
      %v2589 = vunpack.c.h.b16 %v1715
      %v2590 = vunpack.c.l.b16 %v1716
      %v2591 = vunpack.c.h.b16 %v1716
      %v2592 = vunpack.c.l.b16 %v1717
      %v2593 = vunpack.c.h.b16 %v1717
      %v2594 = vunpack.c.l.b16 %v1718
      %v2595 = vunpack.c.h.b16 %v1718
      %v2596 = vunpack.c.l.b16 %v1719
      %v2597 = vunpack.c.h.b16 %v1719
      %v2598 = vunpack.c.l.b16 %v1720
      %v2599 = vunpack.c.h.b16 %v1720
      %v2600 = vunpack.c.l.b16 %v1721
      %v2601 = vunpack.c.h.b16 %v1721
      %v2602 = vunpack.c.l.b16 %v1722
      %v2603 = vunpack.c.h.b16 %v1722
      %v2604 = vunpack.c.l.b16 %v1723
      %v2605 = vunpack.c.h.b16 %v1723
      %v2606 = vpack.c.b16 %v2578, %v2574
      %v2607 = vpack.c.b16 %v2579, %v2575
      %v2608 = vpack.c.b16 %v2580, %v2576
      %v2609 = vpack.c.b16 %v2581, %v2577
      %v2610 = vpack.c.b16 %v2586, %v2582
      %v2611 = vpack.c.b16 %v2587, %v2583
      %v2612 = vpack.c.b16 %v2588, %v2584
      %v2613 = vpack.c.b16 %v2589, %v2585
      %v2614 = vpack.c.b16 %v2594, %v2590
      %v2615 = vpack.c.b16 %v2595, %v2591
      %v2616 = vpack.c.b16 %v2596, %v2592
      %v2617 = vpack.c.b16 %v2597, %v2593
      %v2618 = vpack.c.b16 %v2602, %v2598
      %v2619 = vpack.c.b16 %v2603, %v2599
      %v2620 = vpack.c.b16 %v2604, %v2600
      %v2621 = vpack.c.b16 %v2605, %v2601
      %v2639 = vsel %vm880, %v2557, 0
      %2641 = vmatpush.bf16.msra.mxu0 0
      %2642 = vmatpush.bf16.msra.mxu0 0
      %2643 = vmatpush.bf16.msra.mxu0 0
      %2644 = vmatpush.bf16.msra.mxu0 0
      %2645 = vmatpush.bf16.msra.mxu0 %v2618
      %2646 = vmatpush.bf16.msra.mxu0 %v2614
      %2647 = vmatpush.bf16.msra.mxu0 %v2610
      %2648 = vmatpush.bf16.msra.mxu0 %v2606
      %2649 = vmatmul.bf16.gmra.mxu0 %v2639
      %v2650 = vpop.f32.mrf.mxu0
      %v2651 = vadd.f32 %v1835, %v2650
      %v2652 = vpop.f32.mrf.mxu0
      %2653 = vdwg.mxu0
      %2654 = vmatpush.bf16.msra.mxu0 0
      %2655 = vmatpush.bf16.msra.mxu0 0
      %2656 = vmatpush.bf16.msra.mxu0 0
      %2657 = vmatpush.bf16.msra.mxu0 0
      %2658 = vmatpush.bf16.msra.mxu0 %v2619
      %2659 = vmatpush.bf16.msra.mxu0 %v2615
      %2660 = vmatpush.bf16.msra.mxu0 %v2611
      %2661 = vmatpush.bf16.msra.mxu0 %v2607
      %2662 = vmatmul.bf16.gmra.mxu0 %v2639
      %v2663 = vpop.f32.mrf.mxu0
      %v2664 = vadd.f32 %v1848, %v2663
      %v2665 = vpop.f32.mrf.mxu0
      %2666 = vdwg.mxu0
      %2667 = vmatpush.bf16.msra.mxu0 0
      %2668 = vmatpush.bf16.msra.mxu0 0
      %2669 = vmatpush.bf16.msra.mxu0 0
      %2670 = vmatpush.bf16.msra.mxu0 0
      %2671 = vmatpush.bf16.msra.mxu0 %v2620
      %2672 = vmatpush.bf16.msra.mxu0 %v2616
      %2673 = vmatpush.bf16.msra.mxu0 %v2612
      %2674 = vmatpush.bf16.msra.mxu0 %v2608
      %2675 = vmatmul.bf16.gmra.mxu0 %v2639
      %v2676 = vpop.f32.mrf.mxu0
      %v2677 = vadd.f32 %v1861, %v2676
      %v2678 = vpop.f32.mrf.mxu0
      %2679 = vdwg.mxu0
      %2680 = vmatpush.bf16.msra.mxu0 0
      %2681 = vmatpush.bf16.msra.mxu0 0
      %2682 = vmatpush.bf16.msra.mxu0 0
      %2683 = vmatpush.bf16.msra.mxu0 0
      %2684 = vmatpush.bf16.msra.mxu0 %v2621
      %2685 = vmatpush.bf16.msra.mxu0 %v2617
      %2686 = vmatpush.bf16.msra.mxu0 %v2613
      %2687 = vmatpush.bf16.msra.mxu0 %v2609
      %2688 = vmatmul.bf16.gmra.mxu0 %v2639
      %v2689 = vpop.f32.mrf.mxu0
      %v2690 = vadd.f32 %v1874, %v2689
      %v2691 = vpop.f32.mrf.mxu0
      %2692 = vdwg.mxu0
      %v2693 = vadd.f32 %v1970, %v2107
      %v2694 = vadd.f32 %v1983, %v2120
      %v2695 = vadd.f32 %v1996, %v2133
      %v2696 = vadd.f32 %v2009, %v2146
      %v2697 = vadd.f32 %v2244, %v2378
      %v2698 = vadd.f32 %v2257, %v2391
      %v2699 = vadd.f32 %v2270, %v2404
      %v2700 = vadd.f32 %v2283, %v2417
      %v2701 = vadd.f32 %v2515, %v2651
      %v2702 = vadd.f32 %v2528, %v2664
      %v2703 = vadd.f32 %v2541, %v2677
      %v2704 = vadd.f32 %v2554, %v2690
      %v2705 = vadd.f32 %v2693, %v2697
      %v2706 = vadd.f32 %v2694, %v2698
      %v2707 = vadd.f32 %v2695, %v2699
      %v2708 = vadd.f32 %v2696, %v2700
      %v2709 = vadd.f32 %v2705, %v2701
      %v2710 = vadd.f32 %v2706, %v2702
      %v2711 = vadd.f32 %v2707, %v2703
      %v2712 = vadd.f32 %v2708, %v2704
      %v2717 = vrot.slane %v2710, 7
      %v2718 = vrot.slane %v2711, 6
      %v2719 = vrot.slane %v2712, 5
      %v2720 = vsel %vm743, %v2709, %v2717
      %vm2721 = vcmask 1042434
      %v2722 = vsel %vm2721, %v2718, %v2719
      %v2723 = vsel %vm751, %v2720, %v2722
      %v2725 = vadd.f32 %v1877, %v2723
      %v2726 = vmax.f32 %v2725, 0.0
      %v2728 = vperm.slane %v2726, 0
      %v2729 = vperm.slane %v2726, 1
      %v2730 = vperm.slane %v2726, 2
      %v2731 = vperm.slane %v2726, 3
      %v2736 = vpack.c.bf16 %v2728, %v2728
      %v2737 = vpack.c.bf16 %v2729, %v2729
      %v2738 = vpack.c.bf16 %v2730, %v2730
      %v2739 = vpack.c.bf16 %v2731, %v2731
      %v2740 = vld [vmem:[%s7] sm:$0xf]
      %v2741 = vld [vmem:[%s7 + $0x4] sm:$0xf]
      %v2742 = vld [vmem:[%s7 + $0x8] sm:$0xf]
      %v2743 = vld [vmem:[%s7 + $0xc] sm:$0xf]
      %v2744 = vld [vmem:[%s7 + $0x10] sm:$0xf]
      %v2745 = vld [vmem:[%s7 + $0x14] sm:$0xf]
      %v2746 = vld [vmem:[%s7 + $0x18] sm:$0xf]
      %v2747 = vld [vmem:[%s7 + $0x1c] sm:$0xf]
      %v2748 = vld [vmem:[%s7 + $0x20] sm:$0xf]
      %v2749 = vld [vmem:[%s7 + $0x24] sm:$0xf]
      %v2750 = vld [vmem:[%s7 + $0x28] sm:$0xf]
      %v2751 = vld [vmem:[%s7 + $0x2c] sm:$0xf]
      %v2752 = vld [vmem:[%s7 + $0x30] sm:$0xf]
      %v2753 = vld [vmem:[%s7 + $0x34] sm:$0xf]
      %v2754 = vld [vmem:[%s7 + $0x38] sm:$0xf]
      %v2755 = vld [vmem:[%s7 + $0x3c] sm:$0xf]
      %v2756 = vld [vmem:[%s7 + $0x40] sm:$0xf]
      %v2757 = vld [vmem:[%s7 + $0x44] sm:$0xf]
      %v2758 = vld [vmem:[%s7 + $0x48] sm:$0xf]
      %v2759 = vld [vmem:[%s7 + $0x4c] sm:$0xf]
      %v2760 = vld [vmem:[%s7 + $0x50] sm:$0xf]
      %v2761 = vld [vmem:[%s7 + $0x54] sm:$0xf]
      %v2762 = vld [vmem:[%s7 + $0x58] sm:$0xf]
      %v2763 = vld [vmem:[%s7 + $0x5c] sm:$0xf]
      %v2764 = vld [vmem:[%s7 + $0x60] sm:$0xf]
      %v2765 = vld [vmem:[%s7 + $0x64] sm:$0xf]
      %v2766 = vld [vmem:[%s7 + $0x68] sm:$0xf]
      %v2767 = vld [vmem:[%s7 + $0x6c] sm:$0xf]
      %v2768 = vld [vmem:[%s7 + $0x70] sm:$0xf]
      %v2769 = vld [vmem:[%s7 + $0x74] sm:$0xf]
      %v2770 = vld [vmem:[%s7 + $0x78] sm:$0xf]
      %v2771 = vld [vmem:[%s7 + $0x7c] sm:$0xf]
      %v2772 = vld [vmem:[%s7 + $0x80] sm:$0xf]
      %v2773 = vld [vmem:[%s7 + $0x84] sm:$0xf]
      %v2774 = vld [vmem:[%s7 + $0x88] sm:$0xf]
      %v2775 = vld [vmem:[%s7 + $0x8c] sm:$0xf]
      %v2776 = vld [vmem:[%s7 + $0x90] sm:$0xf]
      %v2777 = vld [vmem:[%s7 + $0x94] sm:$0xf]
      %v2778 = vld [vmem:[%s7 + $0x98] sm:$0xf]
      %v2779 = vld [vmem:[%s7 + $0x9c] sm:$0xf]
      %v2780 = vld [vmem:[%s7 + $0xa0] sm:$0xf]
      %v2781 = vld [vmem:[%s7 + $0xa4] sm:$0xf]
      %v2782 = vld [vmem:[%s7 + $0xa8] sm:$0xf]
      %v2783 = vld [vmem:[%s7 + $0xac] sm:$0xf]
      %v2784 = vld [vmem:[%s7 + $0xb0] sm:$0xf]
      %v2785 = vld [vmem:[%s7 + $0xb4] sm:$0xf]
      %v2786 = vld [vmem:[%s7 + $0xb8] sm:$0xf]
      %v2787 = vld [vmem:[%s7 + $0xbc] sm:$0xf]
      %v2788 = vld [vmem:[%s7 + $0xc0] sm:$0xf]
      %v2789 = vld [vmem:[%s7 + $0xc4] sm:$0xf]
      %v2790 = vld [vmem:[%s7 + $0xc8] sm:$0xf]
      %v2791 = vld [vmem:[%s7 + $0xcc] sm:$0xf]
      %v2792 = vld [vmem:[%s7 + $0xd0] sm:$0xf]
      %v2793 = vld [vmem:[%s7 + $0xd4] sm:$0xf]
      %v2794 = vld [vmem:[%s7 + $0xd8] sm:$0xf]
      %v2795 = vld [vmem:[%s7 + $0xdc] sm:$0xf]
      %v2796 = vld [vmem:[%s7 + $0xe0] sm:$0xf]
      %v2797 = vld [vmem:[%s7 + $0xe4] sm:$0xf]
      %v2798 = vld [vmem:[%s7 + $0xe8] sm:$0xf]
      %v2799 = vld [vmem:[%s7 + $0xec] sm:$0xf]
      %v2800 = vld [vmem:[%s7 + $0xf0] sm:$0xf]
      %v2801 = vld [vmem:[%s7 + $0xf4] sm:$0xf]
      %v2802 = vld [vmem:[%s7 + $0xf8] sm:$0xf]
      %v2803 = vld [vmem:[%s7 + $0xfc] sm:$0xf]
      %v2804 = vld [vmem:[%s8] sm:$0x1]
      %v2869 = vunpack.c.l.b16 %v2740
      %v2870 = vunpack.c.l.b16 %v2741
      %v2871 = vunpack.c.l.b16 %v2742
      %v2872 = vunpack.c.l.b16 %v2743
      %v2873 = vunpack.c.l.b16 %v2744
      %v2874 = vunpack.c.l.b16 %v2745
      %v2875 = vunpack.c.l.b16 %v2746
      %v2876 = vunpack.c.l.b16 %v2747
      %v2877 = vunpack.c.l.b16 %v2748
      %v2878 = vunpack.c.l.b16 %v2749
      %v2879 = vunpack.c.l.b16 %v2750
      %v2880 = vunpack.c.l.b16 %v2751
      %v2881 = vunpack.c.l.b16 %v2752
      %v2882 = vunpack.c.l.b16 %v2753
      %v2883 = vunpack.c.l.b16 %v2754
      %v2884 = vunpack.c.l.b16 %v2755
      %v2885 = vunpack.c.l.b16 %v2756
      %v2886 = vunpack.c.l.b16 %v2757
      %v2887 = vunpack.c.l.b16 %v2758
      %v2888 = vunpack.c.l.b16 %v2759
      %v2889 = vunpack.c.l.b16 %v2760
      %v2890 = vunpack.c.l.b16 %v2761
      %v2891 = vunpack.c.l.b16 %v2762
      %v2892 = vunpack.c.l.b16 %v2763
      %v2893 = vunpack.c.l.b16 %v2764
      %v2894 = vunpack.c.l.b16 %v2765
      %v2895 = vunpack.c.l.b16 %v2766
      %v2896 = vunpack.c.l.b16 %v2767
      %v2897 = vunpack.c.l.b16 %v2768
      %v2898 = vunpack.c.l.b16 %v2769
      %v2899 = vunpack.c.l.b16 %v2770
      %v2900 = vunpack.c.l.b16 %v2771
      %v2901 = vunpack.c.l.b16 %v2772
      %v2902 = vunpack.c.l.b16 %v2773
      %v2903 = vunpack.c.l.b16 %v2774
      %v2904 = vunpack.c.l.b16 %v2775
      %v2905 = vunpack.c.l.b16 %v2776
      %v2906 = vunpack.c.l.b16 %v2777
      %v2907 = vunpack.c.l.b16 %v2778
      %v2908 = vunpack.c.l.b16 %v2779
      %v2909 = vunpack.c.l.b16 %v2780
      %v2910 = vunpack.c.l.b16 %v2781
      %v2911 = vunpack.c.l.b16 %v2782
      %v2912 = vunpack.c.l.b16 %v2783
      %v2913 = vunpack.c.l.b16 %v2784
      %v2914 = vunpack.c.l.b16 %v2785
      %v2915 = vunpack.c.l.b16 %v2786
      %v2916 = vunpack.c.l.b16 %v2787
      %v2917 = vunpack.c.l.b16 %v2788
      %v2918 = vunpack.c.l.b16 %v2789
      %v2919 = vunpack.c.l.b16 %v2790
      %v2920 = vunpack.c.l.b16 %v2791
      %v2921 = vunpack.c.l.b16 %v2792
      %v2922 = vunpack.c.l.b16 %v2793
      %v2923 = vunpack.c.l.b16 %v2794
      %v2924 = vunpack.c.l.b16 %v2795
      %v2925 = vunpack.c.l.b16 %v2796
      %v2926 = vunpack.c.l.b16 %v2797
      %v2927 = vunpack.c.l.b16 %v2798
      %v2928 = vunpack.c.l.b16 %v2799
      %v2929 = vunpack.c.l.b16 %v2800
      %v2930 = vunpack.c.l.b16 %v2801
      %v2931 = vunpack.c.l.b16 %v2802
      %v2932 = vunpack.c.l.b16 %v2803
      %v2933 = vpack.c.b16 %v2870, %v2869
      %v2934 = vpack.c.b16 %v2872, %v2871
      %v2935 = vpack.c.b16 %v2874, %v2873
      %v2936 = vpack.c.b16 %v2876, %v2875
      %v2937 = vpack.c.b16 %v2878, %v2877
      %v2938 = vpack.c.b16 %v2880, %v2879
      %v2939 = vpack.c.b16 %v2882, %v2881
      %v2940 = vpack.c.b16 %v2884, %v2883
      %v2941 = vpack.c.b16 %v2886, %v2885
      %v2942 = vpack.c.b16 %v2888, %v2887
      %v2943 = vpack.c.b16 %v2890, %v2889
      %v2944 = vpack.c.b16 %v2892, %v2891
      %v2945 = vpack.c.b16 %v2894, %v2893
      %v2946 = vpack.c.b16 %v2896, %v2895
      %v2947 = vpack.c.b16 %v2898, %v2897
      %v2948 = vpack.c.b16 %v2900, %v2899
      %v2949 = vpack.c.b16 %v2902, %v2901
      %v2950 = vpack.c.b16 %v2904, %v2903
      %v2951 = vpack.c.b16 %v2906, %v2905
      %v2952 = vpack.c.b16 %v2908, %v2907
      %v2953 = vpack.c.b16 %v2910, %v2909
      %v2954 = vpack.c.b16 %v2912, %v2911
      %v2955 = vpack.c.b16 %v2914, %v2913
      %v2956 = vpack.c.b16 %v2916, %v2915
      %v2957 = vpack.c.b16 %v2918, %v2917
      %v2958 = vpack.c.b16 %v2920, %v2919
      %v2959 = vpack.c.b16 %v2922, %v2921
      %v2960 = vpack.c.b16 %v2924, %v2923
      %v2961 = vpack.c.b16 %v2926, %v2925
      %v2962 = vpack.c.b16 %v2928, %v2927
      %v2963 = vpack.c.b16 %v2930, %v2929
      %v2964 = vpack.c.b16 %v2932, %v2931
      %2997 = vmatpush.bf16.msra.mxu0 %v2940
      %2998 = vmatpush.bf16.msra.mxu0 %v2939
      %2999 = vmatpush.bf16.msra.mxu0 %v2938
      %3000 = vmatpush.bf16.msra.mxu0 %v2937
      %3001 = vmatpush.bf16.msra.mxu0 %v2936
      %3002 = vmatpush.bf16.msra.mxu0 %v2935
      %3003 = vmatpush.bf16.msra.mxu0 %v2934
      %3004 = vmatpush.bf16.msra.mxu0 %v2933
      %3005 = vmatmul.bf16.gmra.mxu0 %v2736
      %v3006 = vpop.f32.mrf.mxu0
      %v3007 = vadd.f32 %v2804, %v3006
      %v3008 = vpop.f32.mrf.mxu0
      %3009 = vdwg.mxu0
      %3010 = vmatpush.bf16.msra.mxu0 %v2948
      %3011 = vmatpush.bf16.msra.mxu0 %v2947
      %3012 = vmatpush.bf16.msra.mxu0 %v2946
      %3013 = vmatpush.bf16.msra.mxu0 %v2945
      %3014 = vmatpush.bf16.msra.mxu0 %v2944
      %3015 = vmatpush.bf16.msra.mxu0 %v2943
      %3016 = vmatpush.bf16.msra.mxu0 %v2942
      %3017 = vmatpush.bf16.msra.mxu0 %v2941
      %3018 = vmatmul.bf16.gmra.mxu0 %v2737
      %v3019 = vpop.f32.mrf.mxu0
      %v3020 = vadd.f32 %v3007, %v3019
      %v3021 = vpop.f32.mrf.mxu0
      %3022 = vdwg.mxu0
      %3023 = vmatpush.bf16.msra.mxu0 %v2956
      %3024 = vmatpush.bf16.msra.mxu0 %v2955
      %3025 = vmatpush.bf16.msra.mxu0 %v2954
      %3026 = vmatpush.bf16.msra.mxu0 %v2953
      %3027 = vmatpush.bf16.msra.mxu0 %v2952
      %3028 = vmatpush.bf16.msra.mxu0 %v2951
      %3029 = vmatpush.bf16.msra.mxu0 %v2950
      %3030 = vmatpush.bf16.msra.mxu0 %v2949
      %3031 = vmatmul.bf16.gmra.mxu0 %v2738
      %v3032 = vpop.f32.mrf.mxu0
      %v3033 = vadd.f32 %v3020, %v3032
      %v3034 = vpop.f32.mrf.mxu0
      %3035 = vdwg.mxu0
      %3036 = vmatpush.bf16.msra.mxu0 %v2964
      %3037 = vmatpush.bf16.msra.mxu0 %v2963
      %3038 = vmatpush.bf16.msra.mxu0 %v2962
      %3039 = vmatpush.bf16.msra.mxu0 %v2961
      %3040 = vmatpush.bf16.msra.mxu0 %v2960
      %3041 = vmatpush.bf16.msra.mxu0 %v2959
      %3042 = vmatpush.bf16.msra.mxu0 %v2958
      %3043 = vmatpush.bf16.msra.mxu0 %v2957
      %3044 = vmatmul.bf16.gmra.mxu0 %v2739
      %v3045 = vpop.f32.mrf.mxu0
      %v3046 = vadd.f32 %v3033, %v3045
      %v3047 = vpop.f32.mrf.mxu0
      %3048 = vdwg.mxu0
      %vm3049 = vcmask 24576
      %v3050 = vsel %vm3049, %v3046, -inf
      %3051 = vmax.xlane.f32.xlu0 %v3050
      %v3052 = vpop.xlane.xlu0 %3051
      %v3053 = vsub.f32 %v3046, %v3052
      %v3054 = vmul.f32 %v3053, 1.442695
      %v3055 = vpow.pop %v3054
      %v3056 = vsel %vm3049, %v3055, 0.0
      %3057 = vadd.xlane.f32.xlu0 %v3056
      %v3058 = vpop.xlane.xlu0 %3057
      %v3059 = vrcp.pop %v3058
      %v3060 = vmul.f32 %v3055, %v3059
      %3061 = vst.msk [vmem:[%s328] sm:$0x1] %vm3049, %v3060
      %p3062 = scmp.lt.s32.totalorder %s20, 7
      %s3063 = scalar_select %p3062, %s20, 7
      %s3064 = scalar_lea.vmem %s9, %s3063
      // Predicated region
      $region57: #{policy_forward.1} parent=55 // pred_check
        %p3065 = pneg %p232
      $region58: #{policy_forward.1} parent=55 // pred_check_branch
        %3067 = sbr.rel (%p3065) target = $region60
      $region59: #{policy_forward.1} parent=55 // pred_region
        _
      $region60: #{policy_forward.1} parent=55 // pred_fallthru
        _
    $region56: #{policy_forward.1} parent=5 // pred_fallthru
      _
    %p3068 = scmp.le.s32.totalorder 2, %s15
    // Predicated region
    $region61: #{policy_forward.1} parent=5 // pred_check
      %p3069 = pneg %p3068
    $region62: #{policy_forward.1} parent=5 // pred_check_branch
      %3071 = sbr.rel (%p3069) target = $region64
    $region63: #{policy_forward.1} parent=5 // pred_region
      %s3072 = ssub.s32 %s15, 2
      // Predicated region
      $region65: #{policy_forward.1} parent=63 // pred_check
        %p3073 = pneg %p238
      $region66: #{policy_forward.1} parent=63 // pred_check_branch
        %3075 = sbr.rel (%p3073) target = $region68
      $region67: #{policy_forward.1} parent=63 // pred_region
        %p3076 = scmp.lt.s32.totalorder %s21, 7
        %s3077 = scalar_select %p3076, %s21, 7
        %s3078 = scalar_lea.vmem %s9, %s3077
      $region68: #{policy_forward.1} parent=63 // pred_fallthru
        _
    $region64: #{policy_forward.1} parent=5 // pred_fallthru
      _
  $region6: #{policy_forward.1} parent=0 // loop_footer
    %s19 = sadd.s32 1, %s15
  $region7: #{policy_forward.1} parent=0 // loop_footer_branch
    %14 = sbr.rel target = $region3
  $region8: #{policy_forward.1} parent=0 // loop_exit
    _

</llo_original>
